<compile_context>
chip_gen: v7x
topology: tpu7x:2x2x1
jax: 0.10.0
libtpu: 0.0.40
codegen_flags: <defaults>
</compile_context>

<pallas_src>
import functools

import numpy as np
import jax
import jax.numpy as jnp
from jax.experimental import pallas as pl
from jax.experimental.pallas import tpu as pltpu


# Fixed architecture constants (match the synthetic policy net).
IN_C, IN_H, IN_W = 4, 16, 16
C1, K1, S1 = 8, 4, 2          # conv1
OH1 = (IN_H - K1) // S1 + 1   # 7
C2, K2 = 16, 3                # conv2 (stride 1)
OH2 = OH1 - K2 + 1            # 5
HID = 32
ACT = 6
ACT_PAD = 128                 # lane-dense padded action width


# ----------------------------------------------------------------------------
# Fused Pallas kernel: conv1 + conv2 + fc + action head, one launch, batched.
# ----------------------------------------------------------------------------
def _fused_policy_kernel(x_ref, w1_ref, b1_ref, w2_ref, b2_ref,
                         wfc_ref, bfc_ref, wact_ref, bact_ref,
                         o_ref, h1_ref, h2_ref, *, batch):
    # x_ref   : (B*16, 64)        rows = (n, h),        cols = (w, c)
    # h1_ref  : (8B+8, 56) scratch rows = (n*8 + oh1),   cols = (ow1, c1)
    # h2_ref  : (8B,   80) scratch rows = (n*8 + oh2),   cols = (ow2, c2)
    nrow1 = 8 * batch - 1   # conv1 rows actually computed (last pad row unused)
    nrow2 = 8 * batch       # conv2 rows (rows with oh2 > 4 are junk, never read)

    # Deterministic padding rows for the contiguous conv2 slabs below.
    h1_ref[...] = jnp.zeros_like(h1_ref)

    # conv1: 4 kernel-row offsets; each is one batched matmul of a stride-2
    # sublane slab of x against a banded (64, 56) weight (column offset j and
    # the stride-2 column selection are folded into the weight).
    acc1 = jnp.zeros((nrow1, OH1 * C1), jnp.float32)
    for i in range(K1):
        slab = x_ref[pl.ds(i, nrow1, stride=2), :]                # (8B-1, 64)
        acc1 = acc1 + jnp.dot(slab, w1_ref[i],
                              preferred_element_type=jnp.float32)
    h1_ref[:nrow1, :] = jnp.maximum(acc1 + b1_ref[...], 0.0)

    # conv2: 3 kernel-row offsets; contiguous full-lane slabs of h1, banded
    # (56, 80) weights with the j offsets folded in.  Batched over all images.
    acc2 = jnp.zeros((nrow2, OH2 * C2), jnp.float32)
    for i in range(K2):
        slab = h1_ref[i: i + nrow2, :]                            # (8B, 56)
        acc2 = acc2 + jnp.dot(slab, w2_ref[i],
                              preferred_element_type=jnp.float32)
    h2_ref[...] = jnp.maximum(acc2 + b2_ref[...], 0.0)

    # fc: 5 batched matmuls, one per oh2 row, gathering the (B, 80) row group
    # with a stride-8 sublane slice (8-aligned per-image blocks make this cheap).
    fco = jnp.zeros((batch, HID), jnp.float32)
    for r in range(OH2):
        rows = h2_ref[pl.ds(r, batch, stride=8), :]               # (B, 80)
        fco = fco + jnp.dot(rows, wfc_ref[r],
                            preferred_element_type=jnp.float32)
    fco = jnp.maximum(fco + bfc_ref[...], 0.0)

    # action head: one matmul + one lane-dense (B, 128) store for the batch.
    o_ref[...] = jnp.dot(fco, wact_ref[...],
                         preferred_element_type=jnp.float32) + bact_ref[...]


# ----------------------------------------------------------------------------
# One-time parameter preparation (outside the jitted forward).
# ----------------------------------------------------------------------------
def prepare_params(params):
    # conv1: per kernel-row offset i, banded weight W1_i[(w, c), (ow1, c1)]
    #   = w1[c1, c, i, w - 2*ow1] if 0 <= w - 2*ow1 < 4 else 0.
    w1 = np.asarray(params["conv1_w"], np.float32)            # (o, c, kh, kw)
    w1b = np.zeros((K1, IN_W, IN_C, OH1, C1), np.float32)
    for i in range(K1):
        for j in range(K1):
            wij = w1[:, :, i, j].T                             # (c, o) = (4, 8)
            for ow in range(OH1):
                w1b[i, S1 * ow + j, :, ow, :] = wij
    w1b = w1b.reshape(K1, IN_W * IN_C, OH1 * C1)               # (4, 64, 56)
    b1 = np.tile(np.asarray(params["conv1_b"], np.float32), OH1)[None, :]

    # conv2: per kernel-row offset i, banded weight W2_i[(ow1, c1), (ow2, c2)]
    #   = w2[c2, c1, i, ow1 - ow2] if 0 <= ow1 - ow2 < 3 else 0.
    w2 = np.asarray(params["conv2_w"], np.float32)             # (o, c, kh, kw)
    w2b = np.zeros((K2, OH1, C1, OH2, C2), np.float32)
    for i in range(K2):
        for j in range(K2):
            wij = w2[:, :, i, j].T                             # (c1, c2) = (8, 16)
            for ow in range(OH2):
                w2b[i, ow + j, :, ow, :] = wij
    w2b = w2b.reshape(K2, OH1 * C1, OH2 * C2)                  # (3, 56, 80)
    b2 = np.tile(np.asarray(params["conv2_b"], np.float32), OH2)[None, :]

    # fc: PyTorch (C,H,W)-flatten ordered (400, 32) -> per-oh2 (80, 32) blocks
    # with input column order (ow2, c2).
    wfc = np.asarray(params["fc_w"], np.float32).reshape(C2, OH2, OH2, HID)
    wfc = wfc.transpose(1, 2, 0, 3).reshape(OH2, OH2 * C2, HID)   # (5, 80, 32)
    bfc = np.asarray(params["fc_b"], np.float32)[None, :]          # (1, 32)

    # action head, zero-padded to 128 lanes for a lane-dense store.
    wact = np.zeros((HID, ACT_PAD), np.float32)
    wact[:, :ACT] = np.asarray(params["act_w"], np.float32)
    bact = np.zeros((1, ACT_PAD), np.float32)
    bact[0, :ACT] = np.asarray(params["act_b"], np.float32)

    out = dict(w1=w1b, b1=b1, w2=w2b, b2=b2, wfc=wfc, bfc=bfc,
               wact=wact, bact=bact)
    return {k: jnp.asarray(v) for k, v in out.items()}


# ----------------------------------------------------------------------------
# Forward pass: layout-only wrapper (NCHW -> NHWC flatten) + one pallas_call.
# ----------------------------------------------------------------------------
def mymodel_forward(prepped, obs):
    """obs: (B, 4, 16, 16) float32 NCHW -> action (B, 6) float32."""
    B = obs.shape[0]
    # Pure layout plumbing: rows = (n, h), cols = (w, c).  No im2col / gather.
    x = jnp.transpose(obs, (0, 2, 3, 1)).reshape(B * IN_H, IN_W * IN_C)

    out = pl.pallas_call(
        functools.partial(_fused_policy_kernel, batch=B),
        out_shape=jax.ShapeDtypeStruct((B, ACT_PAD), jnp.float32),
        in_specs=[pl.BlockSpec(memory_space=pltpu.MemorySpace.VMEM)] * 9,
        out_specs=pl.BlockSpec(memory_space=pltpu.MemorySpace.VMEM),
        scratch_shapes=[
            pltpu.VMEM((8 * B + 8, OH1 * C1), jnp.float32),   # conv1 act (8-aligned + pad)
            pltpu.VMEM((8 * B, OH2 * C2), jnp.float32),       # conv2 act (8-aligned)
        ],
    )(x, prepped["w1"], prepped["b1"], prepped["w2"], prepped["b2"],
      prepped["wfc"], prepped["bfc"], prepped["wact"], prepped["bact"])
    return out[:, :ACT]


# ----------------------------------------------------------------------------
# Synthetic parameters + plain-JAX reference for verification.
# ----------------------------------------------------------------------------
def init_params(key):
    ks = jax.random.split(key, 8)
    s = 0.05
    return {
        "conv1_w": jax.random.normal(ks[0], (C1, IN_C, K1, K1), jnp.float32) * s,
        "conv1_b": jax.random.normal(ks[1], (C1,), jnp.float32) * s,
        "conv2_w": jax.random.normal(ks[2], (C2, C1, K2, K2), jnp.float32) * s,
        "conv2_b": jax.random.normal(ks[3], (C2,), jnp.float32) * s,
        "fc_w": jax.random.normal(ks[4], (C2 * OH2 * OH2, HID), jnp.float32) * s,
        "fc_b": jax.random.normal(ks[5], (HID,), jnp.float32) * s,
        "act_w": jax.random.normal(ks[6], (HID, ACT), jnp.float32) * s,
        "act_b": jax.random.normal(ks[7], (ACT,), jnp.float32) * s,
    }


def reference_forward(params, obs):
    dn = ("NCHW", "OIHW", "NCHW")
    y = jax.lax.conv_general_dilated(obs, params["conv1_w"], (S1, S1), "VALID",
                                     dimension_numbers=dn)
    y = jnp.maximum(y + params["conv1_b"][None, :, None, None], 0.0)
    y = jax.lax.conv_general_dilated(y, params["conv2_w"], (1, 1), "VALID",
                                     dimension_numbers=dn)
    y = jnp.maximum(y + params["conv2_b"][None, :, None, None], 0.0)
    y = y.reshape(y.shape[0], -1)                       # PyTorch (C,H,W) flatten
    y = jnp.maximum(y @ params["fc_w"] + params["fc_b"], 0.0)
    return y @ params["act_w"] + params["act_b"]


if __name__ == "__main__":
    key = jax.random.PRNGKey(0)
    k_obs, k_par = jax.random.split(key)
    obs = jax.random.normal(k_obs, (2, IN_C, IN_H, IN_W), jnp.float32)
    params = init_params(k_par)
    prepped = prepare_params(params)

    action = jax.jit(mymodel_forward)(prepped, obs)
    jax.block_until_ready(action)
    assert action.shape == (2, ACT) and action.dtype == jnp.float32

    expected = reference_forward(params, obs)
    err = float(jnp.max(jnp.abs(action - expected)))
    # Tightened vs. previous 1e-2; remaining slack covers XLA's default
    # bf16-pass matmul/conv precision in the reference vs. the MXU f32 path.
    assert jnp.allclose(action, expected, rtol=5e-3, atol=5e-3), err
    print("KERNEL_OK")
</pallas_src>

<mosaic_0001>
module attributes {stable_mosaic.version = 11 : i64} {
  func.func @_fused_policy_kernel(%arg0: memref<32x64xf32, #tpu.memory_space<vmem>>, %arg1: memref<4x64x56xf32, #tpu.memory_space<vmem>>, %arg2: memref<1x56xf32, #tpu.memory_space<vmem>>, %arg3: memref<3x56x80xf32, #tpu.memory_space<vmem>>, %arg4: memref<1x80xf32, #tpu.memory_space<vmem>>, %arg5: memref<5x80x32xf32, #tpu.memory_space<vmem>>, %arg6: memref<1x32xf32, #tpu.memory_space<vmem>>, %arg7: memref<32x128xf32, #tpu.memory_space<vmem>>, %arg8: memref<1x128xf32, #tpu.memory_space<vmem>>, %arg9: memref<2x128xf32, #tpu.memory_space<vmem>>, %arg10: memref<24x56xf32, #tpu.memory_space<vmem>>, %arg11: memref<16x80xf32, #tpu.memory_space<vmem>>) attributes {dimension_semantics = [], scalar_prefetch = 0 : i64, scratch_operands = 2 : i64, tpu.core_type = #tpu.core_type<tc>} {
    %cst = arith.constant 0.000000e+00 : f32
    %0 = vector.broadcast %cst : f32 to vector<24x56xf32>
    %c0 = arith.constant 0 : index
    %c0_0 = arith.constant 0 : index
    %1 = vector.load %arg10[%c0, %c0_0] : memref<24x56xf32, #tpu.memory_space<vmem>>, vector<24x56xf32>
    tpu.vector_store %arg10[%c0, %c0_0], %0 {strides = array<i32>} : memref<24x56xf32, #tpu.memory_space<vmem>>, vector<24x56xf32>,
    %cst_1 = arith.constant 0.000000e+00 : f32
    %2 = vector.broadcast %cst_1 : f32 to vector<15x56xf32>
    %c0_2 = arith.constant 0 : index
    %c0_3 = arith.constant 0 : index
    %3 = tpu.strided_load %arg0[%c0_2, %c0_3] {strides = array<i32: 2, 1>} : memref<32x64xf32, #tpu.memory_space<vmem>>, vector<15x64xf32>
    %c0_4 = arith.constant 0 : index
    %c0_5 = arith.constant 0 : index
    %c0_6 = arith.constant 0 : index
    %4 = vector.load %arg1[%c0_4, %c0_5, %c0_6] : memref<4x64x56xf32, #tpu.memory_space<vmem>>, vector<1x64x56xf32>
    %5 = vector.shape_cast %4 : vector<1x64x56xf32> to vector<64x56xf32>
    %cst_7 = arith.constant dense<0.000000e+00> : vector<15x56xf32>
    %6 = tpu.matmul %3, %5, %cst_7 {dimension_numbers = #tpu.dot_dimension_numbers<[1], [0], [0], [1], [0, 0, 1, 1], [], []>} : vector<15x64xf32>, vector<64x56xf32>, vector<15x56xf32> -> vector<15x56xf32>
    %7 = arith.addf %2, %6 : vector<15x56xf32>
    %c1 = arith.constant 1 : index
    %c0_8 = arith.constant 0 : index
    %8 = tpu.strided_load %arg0[%c1, %c0_8] {strides = array<i32: 2, 1>} : memref<32x64xf32, #tpu.memory_space<vmem>>, vector<15x64xf32>
    %c1_9 = arith.constant 1 : index
    %c0_10 = arith.constant 0 : index
    %c0_11 = arith.constant 0 : index
    %9 = vector.load %arg1[%c1_9, %c0_10, %c0_11] : memref<4x64x56xf32, #tpu.memory_space<vmem>>, vector<1x64x56xf32>
    %10 = vector.shape_cast %9 : vector<1x64x56xf32> to vector<64x56xf32>
    %cst_12 = arith.constant dense<0.000000e+00> : vector<15x56xf32>
    %11 = tpu.matmul %8, %10, %cst_12 {dimension_numbers = #tpu.dot_dimension_numbers<[1], [0], [0], [1], [0, 0, 1, 1], [], []>} : vector<15x64xf32>, vector<64x56xf32>, vector<15x56xf32> -> vector<15x56xf32>
    %12 = arith.addf %7, %11 : vector<15x56xf32>
    %c2 = arith.constant 2 : index
    %c0_13 = arith.constant 0 : index
    %13 = tpu.strided_load %arg0[%c2, %c0_13] {strides = array<i32: 2, 1>} : memref<32x64xf32, #tpu.memory_space<vmem>>, vector<15x64xf32>
    %c2_14 = arith.constant 2 : index
    %c0_15 = arith.constant 0 : index
    %c0_16 = arith.constant 0 : index
    %14 = vector.load %arg1[%c2_14, %c0_15, %c0_16] : memref<4x64x56xf32, #tpu.memory_space<vmem>>, vector<1x64x56xf32>
    %15 = vector.shape_cast %14 : vector<1x64x56xf32> to vector<64x56xf32>
    %cst_17 = arith.constant dense<0.000000e+00> : vector<15x56xf32>
    %16 = tpu.matmul %13, %15, %cst_17 {dimension_numbers = #tpu.dot_dimension_numbers<[1], [0], [0], [1], [0, 0, 1, 1], [], []>} : vector<15x64xf32>, vector<64x56xf32>, vector<15x56xf32> -> vector<15x56xf32>
    %17 = arith.addf %12, %16 : vector<15x56xf32>
    %c3 = arith.constant 3 : index
    %c0_18 = arith.constant 0 : index
    %18 = tpu.strided_load %arg0[%c3, %c0_18] {strides = array<i32: 2, 1>} : memref<32x64xf32, #tpu.memory_space<vmem>>, vector<15x64xf32>
    %c3_19 = arith.constant 3 : index
    %c0_20 = arith.constant 0 : index
    %c0_21 = arith.constant 0 : index
    %19 = vector.load %arg1[%c3_19, %c0_20, %c0_21] : memref<4x64x56xf32, #tpu.memory_space<vmem>>, vector<1x64x56xf32>
    %20 = vector.shape_cast %19 : vector<1x64x56xf32> to vector<64x56xf32>
    %cst_22 = arith.constant dense<0.000000e+00> : vector<15x56xf32>
    %21 = tpu.matmul %18, %20, %cst_22 {dimension_numbers = #tpu.dot_dimension_numbers<[1], [0], [0], [1], [0, 0, 1, 1], [], []>} : vector<15x64xf32>, vector<64x56xf32>, vector<15x56xf32> -> vector<15x56xf32>
    %22 = arith.addf %17, %21 : vector<15x56xf32>
    %c0_23 = arith.constant 0 : index
    %c0_24 = arith.constant 0 : index
    %23 = vector.load %arg2[%c0_23, %c0_24] : memref<1x56xf32, #tpu.memory_space<vmem>>, vector<1x56xf32>
    %24 = vector.broadcast %23 : vector<1x56xf32> to vector<15x56xf32>
    %25 = arith.addf %22, %24 : vector<15x56xf32>
    %cst_25 = arith.constant 0.000000e+00 : f32
    %26 = vector.broadcast %cst_25 : f32 to vector<15x56xf32>
    %27 = arith.maximumf %25, %26 : vector<15x56xf32>
    %c0_26 = arith.constant 0 : index
    %c0_27 = arith.constant 0 : index
    %28 = vector.load %arg10[%c0_26, %c0_27] : memref<24x56xf32, #tpu.memory_space<vmem>>, vector<15x56xf32>
    tpu.vector_store %arg10[%c0_26, %c0_27], %27 {strides = array<i32>} : memref<24x56xf32, #tpu.memory_space<vmem>>, vector<15x56xf32>,
    %cst_28 = arith.constant 0.000000e+00 : f32
    %29 = vector.broadcast %cst_28 : f32 to vector<16x80xf32>
    %c0_29 = arith.constant 0 : index
    %c0_30 = arith.constant 0 : index
    %30 = vector.load %arg10[%c0_29, %c0_30] : memref<24x56xf32, #tpu.memory_space<vmem>>, vector<16x56xf32>
    %c0_31 = arith.constant 0 : index
    %c0_32 = arith.constant 0 : index
    %c0_33 = arith.constant 0 : index
    %31 = vector.load %arg3[%c0_31, %c0_32, %c0_33] : memref<3x56x80xf32, #tpu.memory_space<vmem>>, vector<1x56x80xf32>
    %32 = vector.shape_cast %31 : vector<1x56x80xf32> to vector<56x80xf32>
    %cst_34 = arith.constant dense<0.000000e+00> : vector<16x80xf32>
    %33 = tpu.matmul %30, %32, %cst_34 {dimension_numbers = #tpu.dot_dimension_numbers<[1], [0], [0], [1], [0, 0, 1, 1], [], []>} : vector<16x56xf32>, vector<56x80xf32>, vector<16x80xf32> -> vector<16x80xf32>
    %34 = arith.addf %29, %33 : vector<16x80xf32>
    %c1_35 = arith.constant 1 : index
    %c0_36 = arith.constant 0 : index
    %35 = vector.load %arg10[%c1_35, %c0_36] : memref<24x56xf32, #tpu.memory_space<vmem>>, vector<16x56xf32>
    %c1_37 = arith.constant 1 : index
    %c0_38 = arith.constant 0 : index
    %c0_39 = arith.constant 0 : index
    %36 = vector.load %arg3[%c1_37, %c0_38, %c0_39] : memref<3x56x80xf32, #tpu.memory_space<vmem>>, vector<1x56x80xf32>
    %37 = vector.shape_cast %36 : vector<1x56x80xf32> to vector<56x80xf32>
    %cst_40 = arith.constant dense<0.000000e+00> : vector<16x80xf32>
    %38 = tpu.matmul %35, %37, %cst_40 {dimension_numbers = #tpu.dot_dimension_numbers<[1], [0], [0], [1], [0, 0, 1, 1], [], []>} : vector<16x56xf32>, vector<56x80xf32>, vector<16x80xf32> -> vector<16x80xf32>
    %39 = arith.addf %34, %38 : vector<16x80xf32>
    %c2_41 = arith.constant 2 : index
    %c0_42 = arith.constant 0 : index
    %40 = vector.load %arg10[%c2_41, %c0_42] : memref<24x56xf32, #tpu.memory_space<vmem>>, vector<16x56xf32>
    %c2_43 = arith.constant 2 : index
    %c0_44 = arith.constant 0 : index
    %c0_45 = arith.constant 0 : index
    %41 = vector.load %arg3[%c2_43, %c0_44, %c0_45] : memref<3x56x80xf32, #tpu.memory_space<vmem>>, vector<1x56x80xf32>
    %42 = vector.shape_cast %41 : vector<1x56x80xf32> to vector<56x80xf32>
    %cst_46 = arith.constant dense<0.000000e+00> : vector<16x80xf32>
    %43 = tpu.matmul %40, %42, %cst_46 {dimension_numbers = #tpu.dot_dimension_numbers<[1], [0], [0], [1], [0, 0, 1, 1], [], []>} : vector<16x56xf32>, vector<56x80xf32>, vector<16x80xf32> -> vector<16x80xf32>
    %44 = arith.addf %39, %43 : vector<16x80xf32>
    %c0_47 = arith.constant 0 : index
    %c0_48 = arith.constant 0 : index
    %45 = vector.load %arg4[%c0_47, %c0_48] : memref<1x80xf32, #tpu.memory_space<vmem>>, vector<1x80xf32>
    %46 = vector.broadcast %45 : vector<1x80xf32> to vector<16x80xf32>
    %47 = arith.addf %44, %46 : vector<16x80xf32>
    %cst_49 = arith.constant 0.000000e+00 : f32
    %48 = vector.broadcast %cst_49 : f32 to vector<16x80xf32>
    %49 = arith.maximumf %47, %48 : vector<16x80xf32>
    %c0_50 = arith.constant 0 : index
    %c0_51 = arith.constant 0 : index
    %50 = vector.load %arg11[%c0_50, %c0_51] : memref<16x80xf32, #tpu.memory_space<vmem>>, vector<16x80xf32>
    tpu.vector_store %arg11[%c0_50, %c0_51], %49 {strides = array<i32>} : memref<16x80xf32, #tpu.memory_space<vmem>>, vector<16x80xf32>,
    %cst_52 = arith.constant 0.000000e+00 : f32
    %51 = vector.broadcast %cst_52 : f32 to vector<2x32xf32>
    %c0_53 = arith.constant 0 : index
    %c0_54 = arith.constant 0 : index
    %52 = tpu.strided_load %arg11[%c0_53, %c0_54] {strides = array<i32: 8, 1>} : memref<16x80xf32, #tpu.memory_space<vmem>>, vector<2x80xf32>
    %c0_55 = arith.constant 0 : index
    %c0_56 = arith.constant 0 : index
    %c0_57 = arith.constant 0 : index
    %53 = vector.load %arg5[%c0_55, %c0_56, %c0_57] : memref<5x80x32xf32, #tpu.memory_space<vmem>>, vector<1x80x32xf32>
    %54 = vector.shape_cast %53 : vector<1x80x32xf32> to vector<80x32xf32>
    %cst_58 = arith.constant dense<0.000000e+00> : vector<2x32xf32>
    %55 = tpu.matmul %52, %54, %cst_58 {dimension_numbers = #tpu.dot_dimension_numbers<[1], [0], [0], [1], [0, 0, 1, 1], [], []>} : vector<2x80xf32>, vector<80x32xf32>, vector<2x32xf32> -> vector<2x32xf32>
    %56 = arith.addf %51, %55 : vector<2x32xf32>
    %c1_59 = arith.constant 1 : index
    %c0_60 = arith.constant 0 : index
    %57 = tpu.strided_load %arg11[%c1_59, %c0_60] {strides = array<i32: 8, 1>} : memref<16x80xf32, #tpu.memory_space<vmem>>, vector<2x80xf32>
    %c1_61 = arith.constant 1 : index
    %c0_62 = arith.constant 0 : index
    %c0_63 = arith.constant 0 : index
    %58 = vector.load %arg5[%c1_61, %c0_62, %c0_63] : memref<5x80x32xf32, #tpu.memory_space<vmem>>, vector<1x80x32xf32>
    %59 = vector.shape_cast %58 : vector<1x80x32xf32> to vector<80x32xf32>
    %cst_64 = arith.constant dense<0.000000e+00> : vector<2x32xf32>
    %60 = tpu.matmul %57, %59, %cst_64 {dimension_numbers = #tpu.dot_dimension_numbers<[1], [0], [0], [1], [0, 0, 1, 1], [], []>} : vector<2x80xf32>, vector<80x32xf32>, vector<2x32xf32> -> vector<2x32xf32>
    %61 = arith.addf %56, %60 : vector<2x32xf32>
    %c2_65 = arith.constant 2 : index
    %c0_66 = arith.constant 0 : index
    %62 = tpu.strided_load %arg11[%c2_65, %c0_66] {strides = array<i32: 8, 1>} : memref<16x80xf32, #tpu.memory_space<vmem>>, vector<2x80xf32>
    %c2_67 = arith.constant 2 : index
    %c0_68 = arith.constant 0 : index
    %c0_69 = arith.constant 0 : index
    %63 = vector.load %arg5[%c2_67, %c0_68, %c0_69] : memref<5x80x32xf32, #tpu.memory_space<vmem>>, vector<1x80x32xf32>
    %64 = vector.shape_cast %63 : vector<1x80x32xf32> to vector<80x32xf32>
    %cst_70 = arith.constant dense<0.000000e+00> : vector<2x32xf32>
    %65 = tpu.matmul %62, %64, %cst_70 {dimension_numbers = #tpu.dot_dimension_numbers<[1], [0], [0], [1], [0, 0, 1, 1], [], []>} : vector<2x80xf32>, vector<80x32xf32>, vector<2x32xf32> -> vector<2x32xf32>
    %66 = arith.addf %61, %65 : vector<2x32xf32>
    %c3_71 = arith.constant 3 : index
    %c0_72 = arith.constant 0 : index
    %67 = tpu.strided_load %arg11[%c3_71, %c0_72] {strides = array<i32: 8, 1>} : memref<16x80xf32, #tpu.memory_space<vmem>>, vector<2x80xf32>
    %c3_73 = arith.constant 3 : index
    %c0_74 = arith.constant 0 : index
    %c0_75 = arith.constant 0 : index
    %68 = vector.load %arg5[%c3_73, %c0_74, %c0_75] : memref<5x80x32xf32, #tpu.memory_space<vmem>>, vector<1x80x32xf32>
    %69 = vector.shape_cast %68 : vector<1x80x32xf32> to vector<80x32xf32>
    %cst_76 = arith.constant dense<0.000000e+00> : vector<2x32xf32>
    %70 = tpu.matmul %67, %69, %cst_76 {dimension_numbers = #tpu.dot_dimension_numbers<[1], [0], [0], [1], [0, 0, 1, 1], [], []>} : vector<2x80xf32>, vector<80x32xf32>, vector<2x32xf32> -> vector<2x32xf32>
    %71 = arith.addf %66, %70 : vector<2x32xf32>
    %c4 = arith.constant 4 : index
    %c0_77 = arith.constant 0 : index
    %72 = tpu.strided_load %arg11[%c4, %c0_77] {strides = array<i32: 8, 1>} : memref<16x80xf32, #tpu.memory_space<vmem>>, vector<2x80xf32>
    %c4_78 = arith.constant 4 : index
    %c0_79 = arith.constant 0 : index
    %c0_80 = arith.constant 0 : index
    %73 = vector.load %arg5[%c4_78, %c0_79, %c0_80] : memref<5x80x32xf32, #tpu.memory_space<vmem>>, vector<1x80x32xf32>
    %74 = vector.shape_cast %73 : vector<1x80x32xf32> to vector<80x32xf32>
    %cst_81 = arith.constant dense<0.000000e+00> : vector<2x32xf32>
    %75 = tpu.matmul %72, %74, %cst_81 {dimension_numbers = #tpu.dot_dimension_numbers<[1], [0], [0], [1], [0, 0, 1, 1], [], []>} : vector<2x80xf32>, vector<80x32xf32>, vector<2x32xf32> -> vector<2x32xf32>
    %76 = arith.addf %71, %75 : vector<2x32xf32>
    %c0_82 = arith.constant 0 : index
    %c0_83 = arith.constant 0 : index
    %77 = vector.load %arg6[%c0_82, %c0_83] : memref<1x32xf32, #tpu.memory_space<vmem>>, vector<1x32xf32>
    %78 = vector.broadcast %77 : vector<1x32xf32> to vector<2x32xf32>
    %79 = arith.addf %76, %78 : vector<2x32xf32>
    %cst_84 = arith.constant 0.000000e+00 : f32
    %80 = vector.broadcast %cst_84 : f32 to vector<2x32xf32>
    %81 = arith.maximumf %79, %80 : vector<2x32xf32>
    %c0_85 = arith.constant 0 : index
    %c0_86 = arith.constant 0 : index
    %82 = vector.load %arg7[%c0_85, %c0_86] : memref<32x128xf32, #tpu.memory_space<vmem>>, vector<32x128xf32>
    %cst_87 = arith.constant dense<0.000000e+00> : vector<2x128xf32>
    %83 = tpu.matmul %81, %82, %cst_87 {dimension_numbers = #tpu.dot_dimension_numbers<[1], [0], [0], [1], [0, 0, 1, 1], [], []>} : vector<2x32xf32>, vector<32x128xf32>, vector<2x128xf32> -> vector<2x128xf32>
    %c0_88 = arith.constant 0 : index
    %c0_89 = arith.constant 0 : index
    %84 = vector.load %arg8[%c0_88, %c0_89] : memref<1x128xf32, #tpu.memory_space<vmem>>, vector<1x128xf32>
    %85 = vector.broadcast %84 : vector<1x128xf32> to vector<2x128xf32>
    %86 = arith.addf %83, %85 : vector<2x128xf32>
    %c0_90 = arith.constant 0 : index
    %c0_91 = arith.constant 0 : index
    %87 = vector.load %arg9[%c0_90, %c0_91] : memref<2x128xf32, #tpu.memory_space<vmem>>, vector<2x128xf32>
    tpu.vector_store %arg9[%c0_90, %c0_91], %86 {strides = array<i32>} : memref<2x128xf32, #tpu.memory_space<vmem>>, vector<2x128xf32>,
    return
  }
}

</mosaic_0001>

<llo_original>
// kernel: mymodel_forward.1
$region0: #{mymodel_forward.1}
  #allocation0 [shape = 'u32[]', space=smem, size = 0x4, offset = 0x4, fixed_abs, tag = 'smem constant byte address 0x4 - core index']
  #allocation1 [shape = 'u32[144,128]{1,0:T(1,128)}', space=vmem, size = 0x12000, scoped, tag = 'internal scratch']
  #allocation2 [shape = 'f32[24,56]{1,0:T(8,128)}', space=vmem, size = 0x3000, scoped, tag = 'scratch operand']
  #allocation3 [shape = 'f32[16,80]{1,0:T(8,128)}', space=vmem, size = 0x2000, scoped, tag = 'scratch operand']
  %s0 = inlined_call_operand.vmem [shape: f32[32,64], index: 0, kind: input, shape index: {}]
  %s1 = inlined_call_operand.vmem [shape: f32[4,64,56], index: 1, kind: input, shape index: {}]
  %s2 = inlined_call_operand.vmem [shape: f32[1,56], index: 2, kind: input, shape index: {}]
  %s3 = inlined_call_operand.vmem [shape: f32[3,56,80], index: 3, kind: input, shape index: {}]
  %s4 = inlined_call_operand.vmem [shape: f32[1,80], index: 4, kind: input, shape index: {}]
  %s5 = inlined_call_operand.vmem [shape: f32[5,80,32], index: 5, kind: input, shape index: {}]
  %s6 = inlined_call_operand.vmem [shape: f32[1,32], index: 6, kind: input, shape index: {}]
  %s7 = inlined_call_operand.vmem [shape: f32[32,128], index: 7, kind: input, shape index: {}]
  %s8 = inlined_call_operand.vmem [shape: f32[1,128], index: 8, kind: input, shape index: {}]
  %s9 = inlined_call_operand.hbm [shape: f32[2,128], index: 9, kind: output, shape index: {}]
  %s10 = sld [smem:[#allocation0]]
  $region46: #{mymodel_forward.1} parent=0
    _
  %s12 = ssub.s32 1, %s10
  %s13 = scalar_select 0, %s12, %s10
  $region1: #{mymodel_forward.1} parent=0
    #allocation4 [shape = 'u8[1024]{0}', space=vmem, size = 0x400, scoped, tag = 'output window, operand 0, single buffered']
    #allocation5 [shape = 's32[1]{0}', space=sflag, size = 0x4, scoped, tag = 'scoped memory for mymodel_forward.1']
    %14 = vsyncpa [#allocation5], 0
    // Predicated region
    $region2: #{mymodel_forward.1} parent=1 // pred_check
      _
    $region3: #{mymodel_forward.1} parent=1 // pred_check_branch
      %16 = sbr.rel (0) target = $region5
    $region4: #{mymodel_forward.1} parent=1 // pred_region
      _
    $region5: #{mymodel_forward.1} parent=1 // pred_fallthru
      _
    // Predicated region
    $region6: #{mymodel_forward.1} parent=1 // pred_check
      _
    $region7: #{mymodel_forward.1} parent=1 // pred_check_branch
      %18 = sbr.rel (0) target = $region9
    $region8: #{mymodel_forward.1} parent=1 // pred_region
      _
    $region9: #{mymodel_forward.1} parent=1 // pred_fallthru
      _
    // Predicated region
    $region10: #{mymodel_forward.1} parent=1 // pred_check
      _
    $region11: #{mymodel_forward.1} parent=1 // pred_check_branch
      %20 = sbr.rel (0) target = $region13
    $region12: #{mymodel_forward.1} parent=1 // pred_region
      _
    $region13: #{mymodel_forward.1} parent=1 // pred_fallthru
      _
    // Predicated region
    $region14: #{mymodel_forward.1} parent=1 // pred_check
      _
    $region15: #{mymodel_forward.1} parent=1 // pred_check_branch
      %22 = sbr.rel (0) target = $region17
    $region16: #{mymodel_forward.1} parent=1 // pred_region
      _
    $region17: #{mymodel_forward.1} parent=1 // pred_fallthru
      _
    // Predicated region
    $region18: #{mymodel_forward.1} parent=1 // pred_check
      _
    $region19: #{mymodel_forward.1} parent=1 // pred_check_branch
      %24 = sbr.rel (0) target = $region21
    $region20: #{mymodel_forward.1} parent=1 // pred_region
      _
    $region21: #{mymodel_forward.1} parent=1 // pred_fallthru
      _
    // Predicated region
    $region22: #{mymodel_forward.1} parent=1 // pred_check
      _
    $region23: #{mymodel_forward.1} parent=1 // pred_check_branch
      %26 = sbr.rel (0) target = $region25
    $region24: #{mymodel_forward.1} parent=1 // pred_region
      _
    $region25: #{mymodel_forward.1} parent=1 // pred_fallthru
      _
    // Predicated region
    $region26: #{mymodel_forward.1} parent=1 // pred_check
      _
    $region27: #{mymodel_forward.1} parent=1 // pred_check_branch
      %28 = sbr.rel (0) target = $region29
    $region28: #{mymodel_forward.1} parent=1 // pred_region
      _
    $region29: #{mymodel_forward.1} parent=1 // pred_fallthru
      _
    // Predicated region
    $region30: #{mymodel_forward.1} parent=1 // pred_check
      _
    $region31: #{mymodel_forward.1} parent=1 // pred_check_branch
      %30 = sbr.rel (0) target = $region33
    $region32: #{mymodel_forward.1} parent=1 // pred_region
      _
    $region33: #{mymodel_forward.1} parent=1 // pred_fallthru
      _
    // Predicated region
    $region34: #{mymodel_forward.1} parent=1 // pred_check
      _
    $region35: #{mymodel_forward.1} parent=1 // pred_check_branch
      %32 = sbr.rel (0) target = $region37
    $region36: #{mymodel_forward.1} parent=1 // pred_region
      _
    $region37: #{mymodel_forward.1} parent=1 // pred_fallthru
      _
    %vm33 = vcmask 457728
    %34 = vst.msk [vmem:[#allocation2] sm:$0xff] %vm33, 0.0
    %35 = vst.msk [vmem:[#allocation2 + $0x8] sm:$0xff] %vm33, 0.0
    %36 = vst.msk [vmem:[#allocation2 + $0x10] sm:$0xff] %vm33, 0.0
    %v37 = vld [vmem:[%s0] ss:$2 sm:$0xff]
    %s38 = scalar_lea.vmem %s0, 16
    %v39 = vld [vmem:[%s38] ss:$2 sm:$0x7f]
    %v40 = vld [vmem:[%s1] sm:$0xff]
    %v41 = vld [vmem:[%s1 + $0x8] sm:$0xff]
    %v42 = vld [vmem:[%s1 + $0x10] sm:$0xff]
    %v43 = vld [vmem:[%s1 + $0x18] sm:$0xff]
    %v44 = vld [vmem:[%s1 + $0x20] sm:$0xff]
    %v45 = vld [vmem:[%s1 + $0x28] sm:$0xff]
    %v46 = vld [vmem:[%s1 + $0x30] sm:$0xff]
    %v47 = vld [vmem:[%s1 + $0x38] sm:$0xff]
    %s48 = scalar_lea.vmem %s0, 1
    %v49 = vld [vmem:[%s48] ss:$2 sm:$0xff]
    %s50 = scalar_lea.vmem %s0, 17
    %v51 = vld [vmem:[%s50] ss:$2 sm:$0x7f]
    %s52 = scalar_lea.vmem %s1, 64
    %v53 = vld [vmem:[%s52] sm:$0xff]
    %v54 = vld [vmem:[%s52 + $0x8] sm:$0xff]
    %v55 = vld [vmem:[%s52 + $0x10] sm:$0xff]
    %v56 = vld [vmem:[%s52 + $0x18] sm:$0xff]
    %v57 = vld [vmem:[%s52 + $0x20] sm:$0xff]
    %v58 = vld [vmem:[%s52 + $0x28] sm:$0xff]
    %v59 = vld [vmem:[%s52 + $0x30] sm:$0xff]
    %v60 = vld [vmem:[%s52 + $0x38] sm:$0xff]
    %vm61 = vcmask 523264
    %v63 = vsel %vm61, %v49, 0
    %v66 = vsel %vm61, %v51, 0
    %68 = vmatprep.subr.mxu0 0.0
    %69 = vmatpush1.msra.mxu0 %v53
    %70 = vmatprep.subr.mxu0 0.0
    %71 = vmatpush1.msra.mxu0 %v54
    %72 = vmatprep.subr.mxu0 0.0
    %73 = vmatpush1.msra.mxu0 %v55
    %74 = vmatprep.subr.mxu0 0.0
    %75 = vmatpush1.msra.mxu0 %v56
    %76 = vmatprep.subr.mxu0 0.0
    %77 = vmatpush1.msra.mxu0 %v57
    %78 = vmatprep.subr.mxu0 0.0
    %79 = vmatpush1.msra.mxu0 %v58
    %80 = vmatprep.subr.mxu0 0.0
    %81 = vmatpush1.msra.mxu0 %v59
    %82 = vmatprep.subr.mxu0 0.0
    %83 = vmatpush1.msra.mxu0 %v60
    %84 = vmatprep.subr.mxu0 0.0
    %85 = vmatpush1.msra.mxu0 0.0
    %86 = vmatprep.subr.mxu0 0.0
    %87 = vmatpush1.msra.mxu0 0.0
    %88 = vmatprep.subr.mxu0 0.0
    %89 = vmatpush1.msra.mxu0 0.0
    %90 = vmatprep.subr.mxu0 0.0
    %91 = vmatpush1.msra.mxu0 0.0
    %92 = vmatprep.subr.mxu0 0.0
    %93 = vmatpush1.msra.mxu0 0.0
    %94 = vmatprep.subr.mxu0 0.0
    %95 = vmatpush1.msra.mxu0 0.0
    %96 = vmatprep.subr.mxu0 0.0
    %97 = vmatpush1.msra.mxu0 0.0
    %98 = vmatprep.subr.mxu0 0.0
    %99 = vmatpush1.msra.mxu0 0.0
    %100 = vmatprep.subr.mxu0 0.0
    %101 = vmatpush1.msra.mxu0 0.0
    %102 = vmatprep.subr.mxu0 0.0
    %103 = vmatpush1.msra.mxu0 0.0
    %104 = vmatprep.subr.mxu0 0.0
    %105 = vmatpush1.msra.mxu0 0.0
    %106 = vmatprep.subr.mxu0 0.0
    %107 = vmatpush1.msra.mxu0 0.0
    %108 = vmatprep.subr.mxu0 0.0
    %109 = vmatpush1.msra.mxu0 0.0
    %110 = vmatprep.subr.mxu0 0.0
    %111 = vmatpush1.msra.mxu0 0.0
    %112 = vmatprep.subr.mxu0 0.0
    %113 = vmatpush1.msra.mxu0 0.0
    %114 = vmatprep.subr.mxu0 0.0
    %115 = vmatpush1.msra.mxu0 0.0
    %116 = vmatprep.subr.mxu0 0.0
    %117 = vmatpush1.msra.mxu0 0.0
    %118 = vmatprep.subr.mxu0 0.0
    %119 = vmatpush1.msra.mxu0 0.0
    %120 = vmatprep.subr.mxu0 0.0
    %121 = vmatpush1.msra.mxu0 0.0
    %122 = vmatprep.subr.mxu0 0.0
    %123 = vmatpush1.msra.mxu0 0.0
    %124 = vmatprep.subr.mxu0 0.0
    %125 = vmatpush1.msra.mxu0 0.0
    %126 = vmatprep.subr.mxu0 0.0
    %127 = vmatpush1.msra.mxu0 0.0
    %128 = vmatprep.subr.mxu0 0.0
    %129 = vmatpush1.msra.mxu0 0.0
    %130 = vmatprep.subr.mxu0 0.0
    %131 = vmatpush1.msra.mxu0 0.0
    %132 = vmatprep.mubr.f32.mxu0 0.0
    %133 = vmatmul.mubr.f32.gmra.mrb[0].mxu0 %v63
    %v134 = vpop.f32.mrb[0].mxu0
    %v135 = vadd.f32 0.0, %v134
    %v136 = vpop.f32.mrb[0].mxu0
    %137 = vmatprep.mubr.f32.mxu0 0.0
    %138 = vmatmul.mubr.f32.gmra.mrb[0].mxu0 %v66
    %v139 = vpop.f32.mrb[0].mxu0
    %v140 = vadd.f32 0.0, %v139
    %v141 = vpop.f32.mrb[0].mxu0
    %142 = vdwg.mxu0
    %v144 = vsel %vm61, %v37, 0
    %v147 = vsel %vm61, %v39, 0
    %149 = vmatprep.subr.mxu0 0.0
    %150 = vmatpush1.msra.mxu0 %v40
    %151 = vmatprep.subr.mxu0 0.0
    %152 = vmatpush1.msra.mxu0 %v41
    %153 = vmatprep.subr.mxu0 0.0
    %154 = vmatpush1.msra.mxu0 %v42
    %155 = vmatprep.subr.mxu0 0.0
    %156 = vmatpush1.msra.mxu0 %v43
    %157 = vmatprep.subr.mxu0 0.0
    %158 = vmatpush1.msra.mxu0 %v44
    %159 = vmatprep.subr.mxu0 0.0
    %160 = vmatpush1.msra.mxu0 %v45
    %161 = vmatprep.subr.mxu0 0.0
    %162 = vmatpush1.msra.mxu0 %v46
    %163 = vmatprep.subr.mxu0 0.0
    %164 = vmatpush1.msra.mxu0 %v47
    %165 = vmatprep.subr.mxu0 0.0
    %166 = vmatpush1.msra.mxu0 0.0
    %167 = vmatprep.subr.mxu0 0.0
    %168 = vmatpush1.msra.mxu0 0.0
    %169 = vmatprep.subr.mxu0 0.0
    %170 = vmatpush1.msra.mxu0 0.0
    %171 = vmatprep.subr.mxu0 0.0
    %172 = vmatpush1.msra.mxu0 0.0
    %173 = vmatprep.subr.mxu0 0.0
    %174 = vmatpush1.msra.mxu0 0.0
    %175 = vmatprep.subr.mxu0 0.0
    %176 = vmatpush1.msra.mxu0 0.0
    %177 = vmatprep.subr.mxu0 0.0
    %178 = vmatpush1.msra.mxu0 0.0
    %179 = vmatprep.subr.mxu0 0.0
    %180 = vmatpush1.msra.mxu0 0.0
    %181 = vmatprep.subr.mxu0 0.0
    %182 = vmatpush1.msra.mxu0 0.0
    %183 = vmatprep.subr.mxu0 0.0
    %184 = vmatpush1.msra.mxu0 0.0
    %185 = vmatprep.subr.mxu0 0.0
    %186 = vmatpush1.msra.mxu0 0.0
    %187 = vmatprep.subr.mxu0 0.0
    %188 = vmatpush1.msra.mxu0 0.0
    %189 = vmatprep.subr.mxu0 0.0
    %190 = vmatpush1.msra.mxu0 0.0
    %191 = vmatprep.subr.mxu0 0.0
    %192 = vmatpush1.msra.mxu0 0.0
    %193 = vmatprep.subr.mxu0 0.0
    %194 = vmatpush1.msra.mxu0 0.0
    %195 = vmatprep.subr.mxu0 0.0
    %196 = vmatpush1.msra.mxu0 0.0
    %197 = vmatprep.subr.mxu0 0.0
    %198 = vmatpush1.msra.mxu0 0.0
    %199 = vmatprep.subr.mxu0 0.0
    %200 = vmatpush1.msra.mxu0 0.0
    %201 = vmatprep.subr.mxu0 0.0
    %202 = vmatpush1.msra.mxu0 0.0
    %203 = vmatprep.subr.mxu0 0.0
    %204 = vmatpush1.msra.mxu0 0.0
    %205 = vmatprep.subr.mxu0 0.0
    %206 = vmatpush1.msra.mxu0 0.0
    %207 = vmatprep.subr.mxu0 0.0
    %208 = vmatpush1.msra.mxu0 0.0
    %209 = vmatprep.subr.mxu0 0.0
    %210 = vmatpush1.msra.mxu0 0.0
    %211 = vmatprep.subr.mxu0 0.0
    %212 = vmatpush1.msra.mxu0 0.0
    %213 = vmatprep.mubr.f32.mxu0 0.0
    %214 = vmatmul.mubr.f32.gmra.mrb[0].mxu0 %v144
    %v215 = vpop.f32.mrb[0].mxu0
    %v216 = vadd.f32 %v135, %v215
    %v217 = vpop.f32.mrb[0].mxu0
    %218 = vmatprep.mubr.f32.mxu0 0.0
    %219 = vmatmul.mubr.f32.gmra.mrb[0].mxu0 %v147
    %v220 = vpop.f32.mrb[0].mxu0
    %v221 = vadd.f32 %v140, %v220
    %v222 = vpop.f32.mrb[0].mxu0
    %223 = vdwg.mxu0
    %s224 = scalar_lea.vmem %s0, 2
    %v225 = vld [vmem:[%s224] ss:$2 sm:$0xff]
    %s226 = scalar_lea.vmem %s0, 18
    %v227 = vld [vmem:[%s226] ss:$2 sm:$0x7f]
    %s228 = scalar_lea.vmem %s1, 128
    %v229 = vld [vmem:[%s228] sm:$0xff]
    %v230 = vld [vmem:[%s228 + $0x8] sm:$0xff]
    %v231 = vld [vmem:[%s228 + $0x10] sm:$0xff]
    %v232 = vld [vmem:[%s228 + $0x18] sm:$0xff]
    %v233 = vld [vmem:[%s228 + $0x20] sm:$0xff]
    %v234 = vld [vmem:[%s228 + $0x28] sm:$0xff]
    %v235 = vld [vmem:[%s228 + $0x30] sm:$0xff]
    %v236 = vld [vmem:[%s228 + $0x38] sm:$0xff]
    %v238 = vsel %vm61, %v225, 0
    %v241 = vsel %vm61, %v227, 0
    %243 = vmatprep.subr.mxu0 0.0
    %244 = vmatpush1.msra.mxu0 %v229
    %245 = vmatprep.subr.mxu0 0.0
    %246 = vmatpush1.msra.mxu0 %v230
    %247 = vmatprep.subr.mxu0 0.0
    %248 = vmatpush1.msra.mxu0 %v231
    %249 = vmatprep.subr.mxu0 0.0
    %250 = vmatpush1.msra.mxu0 %v232
    %251 = vmatprep.subr.mxu0 0.0
    %252 = vmatpush1.msra.mxu0 %v233
    %253 = vmatprep.subr.mxu0 0.0
    %254 = vmatpush1.msra.mxu0 %v234
    %255 = vmatprep.subr.mxu0 0.0
    %256 = vmatpush1.msra.mxu0 %v235
    %257 = vmatprep.subr.mxu0 0.0
    %258 = vmatpush1.msra.mxu0 %v236
    %259 = vmatprep.subr.mxu0 0.0
    %260 = vmatpush1.msra.mxu0 0.0
    %261 = vmatprep.subr.mxu0 0.0
    %262 = vmatpush1.msra.mxu0 0.0
    %263 = vmatprep.subr.mxu0 0.0
    %264 = vmatpush1.msra.mxu0 0.0
    %265 = vmatprep.subr.mxu0 0.0
    %266 = vmatpush1.msra.mxu0 0.0
    %267 = vmatprep.subr.mxu0 0.0
    %268 = vmatpush1.msra.mxu0 0.0
    %269 = vmatprep.subr.mxu0 0.0
    %270 = vmatpush1.msra.mxu0 0.0
    %271 = vmatprep.subr.mxu0 0.0
    %272 = vmatpush1.msra.mxu0 0.0
    %273 = vmatprep.subr.mxu0 0.0
    %274 = vmatpush1.msra.mxu0 0.0
    %275 = vmatprep.subr.mxu0 0.0
    %276 = vmatpush1.msra.mxu0 0.0
    %277 = vmatprep.subr.mxu0 0.0
    %278 = vmatpush1.msra.mxu0 0.0
    %279 = vmatprep.subr.mxu0 0.0
    %280 = vmatpush1.msra.mxu0 0.0
    %281 = vmatprep.subr.mxu0 0.0
    %282 = vmatpush1.msra.mxu0 0.0
    %283 = vmatprep.subr.mxu0 0.0
    %284 = vmatpush1.msra.mxu0 0.0
    %285 = vmatprep.subr.mxu0 0.0
    %286 = vmatpush1.msra.mxu0 0.0
    %287 = vmatprep.subr.mxu0 0.0
    %288 = vmatpush1.msra.mxu0 0.0
    %289 = vmatprep.subr.mxu0 0.0
    %290 = vmatpush1.msra.mxu0 0.0
    %291 = vmatprep.subr.mxu0 0.0
    %292 = vmatpush1.msra.mxu0 0.0
    %293 = vmatprep.subr.mxu0 0.0
    %294 = vmatpush1.msra.mxu0 0.0
    %295 = vmatprep.subr.mxu0 0.0
    %296 = vmatpush1.msra.mxu0 0.0
    %297 = vmatprep.subr.mxu0 0.0
    %298 = vmatpush1.msra.mxu0 0.0
    %299 = vmatprep.subr.mxu0 0.0
    %300 = vmatpush1.msra.mxu0 0.0
    %301 = vmatprep.subr.mxu0 0.0
    %302 = vmatpush1.msra.mxu0 0.0
    %303 = vmatprep.subr.mxu0 0.0
    %304 = vmatpush1.msra.mxu0 0.0
    %305 = vmatprep.subr.mxu0 0.0
    %306 = vmatpush1.msra.mxu0 0.0
    %307 = vmatprep.mubr.f32.mxu0 0.0
    %308 = vmatmul.mubr.f32.gmra.mrb[0].mxu0 %v238
    %v309 = vpop.f32.mrb[0].mxu0
    %v310 = vadd.f32 0.0, %v309
    %v311 = vpop.f32.mrb[0].mxu0
    %312 = vmatprep.mubr.f32.mxu0 0.0
    %313 = vmatmul.mubr.f32.gmra.mrb[0].mxu0 %v241
    %v314 = vpop.f32.mrb[0].mxu0
    %v315 = vadd.f32 0.0, %v314
    %v316 = vpop.f32.mrb[0].mxu0
    %317 = vdwg.mxu0
    %v318 = vadd.f32 %v216, %v310
    %v319 = vadd.f32 %v221, %v315
    %s320 = scalar_lea.vmem %s0, 3
    %v321 = vld [vmem:[%s320] ss:$2 sm:$0xff]
    %s322 = scalar_lea.vmem %s0, 19
    %v323 = vld [vmem:[%s322] ss:$2 sm:$0x7f]
    %s324 = scalar_lea.vmem %s1, 192
    %v325 = vld [vmem:[%s324] sm:$0xff]
    %v326 = vld [vmem:[%s324 + $0x8] sm:$0xff]
    %v327 = vld [vmem:[%s324 + $0x10] sm:$0xff]
    %v328 = vld [vmem:[%s324 + $0x18] sm:$0xff]
    %v329 = vld [vmem:[%s324 + $0x20] sm:$0xff]
    %v330 = vld [vmem:[%s324 + $0x28] sm:$0xff]
    %v331 = vld [vmem:[%s324 + $0x30] sm:$0xff]
    %v332 = vld [vmem:[%s324 + $0x38] sm:$0xff]
    %v334 = vsel %vm61, %v321, 0
    %v337 = vsel %vm61, %v323, 0
    %339 = vmatprep.subr.mxu0 0.0
    %340 = vmatpush1.msra.mxu0 %v325
    %341 = vmatprep.subr.mxu0 0.0
    %342 = vmatpush1.msra.mxu0 %v326
    %343 = vmatprep.subr.mxu0 0.0
    %344 = vmatpush1.msra.mxu0 %v327
    %345 = vmatprep.subr.mxu0 0.0
    %346 = vmatpush1.msra.mxu0 %v328
    %347 = vmatprep.subr.mxu0 0.0
    %348 = vmatpush1.msra.mxu0 %v329
    %349 = vmatprep.subr.mxu0 0.0
    %350 = vmatpush1.msra.mxu0 %v330
    %351 = vmatprep.subr.mxu0 0.0
    %352 = vmatpush1.msra.mxu0 %v331
    %353 = vmatprep.subr.mxu0 0.0
    %354 = vmatpush1.msra.mxu0 %v332
    %355 = vmatprep.subr.mxu0 0.0
    %356 = vmatpush1.msra.mxu0 0.0
    %357 = vmatprep.subr.mxu0 0.0
    %358 = vmatpush1.msra.mxu0 0.0
    %359 = vmatprep.subr.mxu0 0.0
    %360 = vmatpush1.msra.mxu0 0.0
    %361 = vmatprep.subr.mxu0 0.0
    %362 = vmatpush1.msra.mxu0 0.0
    %363 = vmatprep.subr.mxu0 0.0
    %364 = vmatpush1.msra.mxu0 0.0
    %365 = vmatprep.subr.mxu0 0.0
    %366 = vmatpush1.msra.mxu0 0.0
    %367 = vmatprep.subr.mxu0 0.0
    %368 = vmatpush1.msra.mxu0 0.0
    %369 = vmatprep.subr.mxu0 0.0
    %370 = vmatpush1.msra.mxu0 0.0
    %371 = vmatprep.subr.mxu0 0.0
    %372 = vmatpush1.msra.mxu0 0.0
    %373 = vmatprep.subr.mxu0 0.0
    %374 = vmatpush1.msra.mxu0 0.0
    %375 = vmatprep.subr.mxu0 0.0
    %376 = vmatpush1.msra.mxu0 0.0
    %377 = vmatprep.subr.mxu0 0.0
    %378 = vmatpush1.msra.mxu0 0.0
    %379 = vmatprep.subr.mxu0 0.0
    %380 = vmatpush1.msra.mxu0 0.0
    %381 = vmatprep.subr.mxu0 0.0
    %382 = vmatpush1.msra.mxu0 0.0
    %383 = vmatprep.subr.mxu0 0.0
    %384 = vmatpush1.msra.mxu0 0.0
    %385 = vmatprep.subr.mxu0 0.0
    %386 = vmatpush1.msra.mxu0 0.0
    %387 = vmatprep.subr.mxu0 0.0
    %388 = vmatpush1.msra.mxu0 0.0
    %389 = vmatprep.subr.mxu0 0.0
    %390 = vmatpush1.msra.mxu0 0.0
    %391 = vmatprep.subr.mxu0 0.0
    %392 = vmatpush1.msra.mxu0 0.0
    %393 = vmatprep.subr.mxu0 0.0
    %394 = vmatpush1.msra.mxu0 0.0
    %395 = vmatprep.subr.mxu0 0.0
    %396 = vmatpush1.msra.mxu0 0.0
    %397 = vmatprep.subr.mxu0 0.0
    %398 = vmatpush1.msra.mxu0 0.0
    %399 = vmatprep.subr.mxu0 0.0
    %400 = vmatpush1.msra.mxu0 0.0
    %401 = vmatprep.subr.mxu0 0.0
    %402 = vmatpush1.msra.mxu0 0.0
    %403 = vmatprep.mubr.f32.mxu0 0.0
    %404 = vmatmul.mubr.f32.gmra.mrb[0].mxu0 %v334
    %v405 = vpop.f32.mrb[0].mxu0
    %v406 = vadd.f32 0.0, %v405
    %v407 = vpop.f32.mrb[0].mxu0
    %408 = vmatprep.mubr.f32.mxu0 0.0
    %409 = vmatmul.mubr.f32.gmra.mrb[0].mxu0 %v337
    %v410 = vpop.f32.mrb[0].mxu0
    %v411 = vadd.f32 0.0, %v410
    %v412 = vpop.f32.mrb[0].mxu0
    %413 = vdwg.mxu0
    %v414 = vadd.f32 %v318, %v406
    %v415 = vadd.f32 %v319, %v411
    %v416 = vld [vmem:[%s2] sm:$0x1]
    %v418 = vlaneseq
    %v419 = vshrl.u32 %v418, 7
    %v420 = vsub.s32 0, %v419
    %v421 = vrot.slane %v416, %v420
    %v423 = vadd.f32 %v414, %v421
    %v424 = vadd.f32 %v415, %v421
    %v425 = vmax.f32 %v423, 0.0
    %v426 = vmax.f32 %v424, 0.0
    %427 = vst.msk [vmem:[#allocation2] sm:$0xff] %vm33, %v425
    %vm428 = vcmask 456704
    %429 = vst.msk [vmem:[#allocation2 + $0x8] sm:$0x7f] %vm428, %v426
    %v430 = vld [vmem:[#allocation2] sm:$0xff]
    %v431 = vld [vmem:[#allocation2 + $0x8] sm:$0xff]
    %v432 = vld [vmem:[%s3] sm:$0xff]
    %v433 = vld [vmem:[%s3 + $0x8] sm:$0xff]
    %v434 = vld [vmem:[%s3 + $0x10] sm:$0xff]
    %v435 = vld [vmem:[%s3 + $0x18] sm:$0xff]
    %v436 = vld [vmem:[%s3 + $0x20] sm:$0xff]
    %v437 = vld [vmem:[%s3 + $0x28] sm:$0xff]
    %v438 = vld [vmem:[%s3 + $0x30] sm:$0xff]
    %v439 = vld [vmem:[#allocation2 + $0x1] sm:$0xff]
    %v440 = vld [vmem:[#allocation2 + $0x9] sm:$0xff]
    %s441 = scalar_lea.vmem %s3, 56
    %v442 = vld [vmem:[%s441] sm:$0xff]
    %v443 = vld [vmem:[%s441 + $0x8] sm:$0xff]
    %v444 = vld [vmem:[%s441 + $0x10] sm:$0xff]
    %v445 = vld [vmem:[%s441 + $0x18] sm:$0xff]
    %v446 = vld [vmem:[%s441 + $0x20] sm:$0xff]
    %v447 = vld [vmem:[%s441 + $0x28] sm:$0xff]
    %v448 = vld [vmem:[%s441 + $0x30] sm:$0xff]
    %v450 = vsel %vm33, %v439, 0
    %v453 = vsel %vm33, %v440, 0
    %455 = vmatprep.subr.mxu0 0.0
    %456 = vmatpush1.msra.mxu0 %v442
    %457 = vmatprep.subr.mxu0 0.0
    %458 = vmatpush1.msra.mxu0 %v443
    %459 = vmatprep.subr.mxu0 0.0
    %460 = vmatpush1.msra.mxu0 %v444
    %461 = vmatprep.subr.mxu0 0.0
    %462 = vmatpush1.msra.mxu0 %v445
    %463 = vmatprep.subr.mxu0 0.0
    %464 = vmatpush1.msra.mxu0 %v446
    %465 = vmatprep.subr.mxu0 0.0
    %466 = vmatpush1.msra.mxu0 %v447
    %467 = vmatprep.subr.mxu0 0.0
    %468 = vmatpush1.msra.mxu0 %v448
    %469 = vmatprep.subr.mxu0 0.0
    %470 = vmatpush1.msra.mxu0 0.0
    %471 = vmatprep.subr.mxu0 0.0
    %472 = vmatpush1.msra.mxu0 0.0
    %473 = vmatprep.subr.mxu0 0.0
    %474 = vmatpush1.msra.mxu0 0.0
    %475 = vmatprep.subr.mxu0 0.0
    %476 = vmatpush1.msra.mxu0 0.0
    %477 = vmatprep.subr.mxu0 0.0
    %478 = vmatpush1.msra.mxu0 0.0
    %479 = vmatprep.subr.mxu0 0.0
    %480 = vmatpush1.msra.mxu0 0.0
    %481 = vmatprep.subr.mxu0 0.0
    %482 = vmatpush1.msra.mxu0 0.0
    %483 = vmatprep.subr.mxu0 0.0
    %484 = vmatpush1.msra.mxu0 0.0
    %485 = vmatprep.subr.mxu0 0.0
    %486 = vmatpush1.msra.mxu0 0.0
    %487 = vmatprep.subr.mxu0 0.0
    %488 = vmatpush1.msra.mxu0 0.0
    %489 = vmatprep.subr.mxu0 0.0
    %490 = vmatpush1.msra.mxu0 0.0
    %491 = vmatprep.subr.mxu0 0.0
    %492 = vmatpush1.msra.mxu0 0.0
    %493 = vmatprep.subr.mxu0 0.0
    %494 = vmatpush1.msra.mxu0 0.0
    %495 = vmatprep.subr.mxu0 0.0
    %496 = vmatpush1.msra.mxu0 0.0
    %497 = vmatprep.subr.mxu0 0.0
    %498 = vmatpush1.msra.mxu0 0.0
    %499 = vmatprep.subr.mxu0 0.0
    %500 = vmatpush1.msra.mxu0 0.0
    %501 = vmatprep.subr.mxu0 0.0
    %502 = vmatpush1.msra.mxu0 0.0
    %503 = vmatprep.subr.mxu0 0.0
    %504 = vmatpush1.msra.mxu0 0.0
    %505 = vmatprep.subr.mxu0 0.0
    %506 = vmatpush1.msra.mxu0 0.0
    %507 = vmatprep.subr.mxu0 0.0
    %508 = vmatpush1.msra.mxu0 0.0
    %509 = vmatprep.subr.mxu0 0.0
    %510 = vmatpush1.msra.mxu0 0.0
    %511 = vmatprep.subr.mxu0 0.0
    %512 = vmatpush1.msra.mxu0 0.0
    %513 = vmatprep.subr.mxu0 0.0
    %514 = vmatpush1.msra.mxu0 0.0
    %515 = vmatprep.subr.mxu0 0.0
    %516 = vmatpush1.msra.mxu0 0.0
    %517 = vmatprep.subr.mxu0 0.0
    %518 = vmatpush1.msra.mxu0 0.0
    %519 = vmatprep.mubr.f32.mxu0 0.0
    %520 = vmatmul.mubr.f32.gmra.mrb[0].mxu0 %v450
    %v521 = vpop.f32.mrb[0].mxu0
    %v522 = vadd.f32 0.0, %v521
    %v523 = vpop.f32.mrb[0].mxu0
    %524 = vmatprep.mubr.f32.mxu0 0.0
    %525 = vmatmul.mubr.f32.gmra.mrb[0].mxu0 %v453
    %v526 = vpop.f32.mrb[0].mxu0
    %v527 = vadd.f32 0.0, %v526
    %v528 = vpop.f32.mrb[0].mxu0
    %529 = vdwg.mxu0
    %v531 = vsel %vm33, %v430, 0
    %v534 = vsel %vm33, %v431, 0
    %536 = vmatprep.subr.mxu0 0.0
    %537 = vmatpush1.msra.mxu0 %v432
    %538 = vmatprep.subr.mxu0 0.0
    %539 = vmatpush1.msra.mxu0 %v433
    %540 = vmatprep.subr.mxu0 0.0
    %541 = vmatpush1.msra.mxu0 %v434
    %542 = vmatprep.subr.mxu0 0.0
    %543 = vmatpush1.msra.mxu0 %v435
    %544 = vmatprep.subr.mxu0 0.0
    %545 = vmatpush1.msra.mxu0 %v436
    %546 = vmatprep.subr.mxu0 0.0
    %547 = vmatpush1.msra.mxu0 %v437
    %548 = vmatprep.subr.mxu0 0.0
    %549 = vmatpush1.msra.mxu0 %v438
    %550 = vmatprep.subr.mxu0 0.0
    %551 = vmatpush1.msra.mxu0 0.0
    %552 = vmatprep.subr.mxu0 0.0
    %553 = vmatpush1.msra.mxu0 0.0
    %554 = vmatprep.subr.mxu0 0.0
    %555 = vmatpush1.msra.mxu0 0.0
    %556 = vmatprep.subr.mxu0 0.0
    %557 = vmatpush1.msra.mxu0 0.0
    %558 = vmatprep.subr.mxu0 0.0
    %559 = vmatpush1.msra.mxu0 0.0
    %560 = vmatprep.subr.mxu0 0.0
    %561 = vmatpush1.msra.mxu0 0.0
    %562 = vmatprep.subr.mxu0 0.0
    %563 = vmatpush1.msra.mxu0 0.0
    %564 = vmatprep.subr.mxu0 0.0
    %565 = vmatpush1.msra.mxu0 0.0
    %566 = vmatprep.subr.mxu0 0.0
    %567 = vmatpush1.msra.mxu0 0.0
    %568 = vmatprep.subr.mxu0 0.0
    %569 = vmatpush1.msra.mxu0 0.0
    %570 = vmatprep.subr.mxu0 0.0
    %571 = vmatpush1.msra.mxu0 0.0
    %572 = vmatprep.subr.mxu0 0.0
    %573 = vmatpush1.msra.mxu0 0.0
    %574 = vmatprep.subr.mxu0 0.0
    %575 = vmatpush1.msra.mxu0 0.0
    %576 = vmatprep.subr.mxu0 0.0
    %577 = vmatpush1.msra.mxu0 0.0
    %578 = vmatprep.subr.mxu0 0.0
    %579 = vmatpush1.msra.mxu0 0.0
    %580 = vmatprep.subr.mxu0 0.0
    %581 = vmatpush1.msra.mxu0 0.0
    %582 = vmatprep.subr.mxu0 0.0
    %583 = vmatpush1.msra.mxu0 0.0
    %584 = vmatprep.subr.mxu0 0.0
    %585 = vmatpush1.msra.mxu0 0.0
    %586 = vmatprep.subr.mxu0 0.0
    %587 = vmatpush1.msra.mxu0 0.0
    %588 = vmatprep.subr.mxu0 0.0
    %589 = vmatpush1.msra.mxu0 0.0
    %590 = vmatprep.subr.mxu0 0.0
    %591 = vmatpush1.msra.mxu0 0.0
    %592 = vmatprep.subr.mxu0 0.0
    %593 = vmatpush1.msra.mxu0 0.0
    %594 = vmatprep.subr.mxu0 0.0
    %595 = vmatpush1.msra.mxu0 0.0
    %596 = vmatprep.subr.mxu0 0.0
    %597 = vmatpush1.msra.mxu0 0.0
    %598 = vmatprep.subr.mxu0 0.0
    %599 = vmatpush1.msra.mxu0 0.0
    %600 = vmatprep.mubr.f32.mxu0 0.0
    %601 = vmatmul.mubr.f32.gmra.mrb[0].mxu0 %v531
    %v602 = vpop.f32.mrb[0].mxu0
    %v603 = vadd.f32 %v522, %v602
    %v604 = vpop.f32.mrb[0].mxu0
    %605 = vmatprep.mubr.f32.mxu0 0.0
    %606 = vmatmul.mubr.f32.gmra.mrb[0].mxu0 %v534
    %v607 = vpop.f32.mrb[0].mxu0
    %v608 = vadd.f32 %v527, %v607
    %v609 = vpop.f32.mrb[0].mxu0
    %610 = vdwg.mxu0
    %v611 = vld [vmem:[#allocation2 + $0x2] sm:$0xff]
    %v612 = vld [vmem:[#allocation2 + $0xa] sm:$0xff]
    %s613 = scalar_lea.vmem %s3, 112
    %v614 = vld [vmem:[%s613] sm:$0xff]
    %v615 = vld [vmem:[%s613 + $0x8] sm:$0xff]
    %v616 = vld [vmem:[%s613 + $0x10] sm:$0xff]
    %v617 = vld [vmem:[%s613 + $0x18] sm:$0xff]
    %v618 = vld [vmem:[%s613 + $0x20] sm:$0xff]
    %v619 = vld [vmem:[%s613 + $0x28] sm:$0xff]
    %v620 = vld [vmem:[%s613 + $0x30] sm:$0xff]
    %v622 = vsel %vm33, %v611, 0
    %v625 = vsel %vm33, %v612, 0
    %627 = vmatprep.subr.mxu0 0.0
    %628 = vmatpush1.msra.mxu0 %v614
    %629 = vmatprep.subr.mxu0 0.0
    %630 = vmatpush1.msra.mxu0 %v615
    %631 = vmatprep.subr.mxu0 0.0
    %632 = vmatpush1.msra.mxu0 %v616
    %633 = vmatprep.subr.mxu0 0.0
    %634 = vmatpush1.msra.mxu0 %v617
    %635 = vmatprep.subr.mxu0 0.0
    %636 = vmatpush1.msra.mxu0 %v618
    %637 = vmatprep.subr.mxu0 0.0
    %638 = vmatpush1.msra.mxu0 %v619
    %639 = vmatprep.subr.mxu0 0.0
    %640 = vmatpush1.msra.mxu0 %v620
    %641 = vmatprep.subr.mxu0 0.0
    %642 = vmatpush1.msra.mxu0 0.0
    %643 = vmatprep.subr.mxu0 0.0
    %644 = vmatpush1.msra.mxu0 0.0
    %645 = vmatprep.subr.mxu0 0.0
    %646 = vmatpush1.msra.mxu0 0.0
    %647 = vmatprep.subr.mxu0 0.0
    %648 = vmatpush1.msra.mxu0 0.0
    %649 = vmatprep.subr.mxu0 0.0
    %650 = vmatpush1.msra.mxu0 0.0
    %651 = vmatprep.subr.mxu0 0.0
    %652 = vmatpush1.msra.mxu0 0.0
    %653 = vmatprep.subr.mxu0 0.0
    %654 = vmatpush1.msra.mxu0 0.0
    %655 = vmatprep.subr.mxu0 0.0
    %656 = vmatpush1.msra.mxu0 0.0
    %657 = vmatprep.subr.mxu0 0.0
    %658 = vmatpush1.msra.mxu0 0.0
    %659 = vmatprep.subr.mxu0 0.0
    %660 = vmatpush1.msra.mxu0 0.0
    %661 = vmatprep.subr.mxu0 0.0
    %662 = vmatpush1.msra.mxu0 0.0
    %663 = vmatprep.subr.mxu0 0.0
    %664 = vmatpush1.msra.mxu0 0.0
    %665 = vmatprep.subr.mxu0 0.0
    %666 = vmatpush1.msra.mxu0 0.0
    %667 = vmatprep.subr.mxu0 0.0
    %668 = vmatpush1.msra.mxu0 0.0
    %669 = vmatprep.subr.mxu0 0.0
    %670 = vmatpush1.msra.mxu0 0.0
    %671 = vmatprep.subr.mxu0 0.0
    %672 = vmatpush1.msra.mxu0 0.0
    %673 = vmatprep.subr.mxu0 0.0
    %674 = vmatpush1.msra.mxu0 0.0
    %675 = vmatprep.subr.mxu0 0.0
    %676 = vmatpush1.msra.mxu0 0.0
    %677 = vmatprep.subr.mxu0 0.0
    %678 = vmatpush1.msra.mxu0 0.0
    %679 = vmatprep.subr.mxu0 0.0
    %680 = vmatpush1.msra.mxu0 0.0
    %681 = vmatprep.subr.mxu0 0.0
    %682 = vmatpush1.msra.mxu0 0.0
    %683 = vmatprep.subr.mxu0 0.0
    %684 = vmatpush1.msra.mxu0 0.0
    %685 = vmatprep.subr.mxu0 0.0
    %686 = vmatpush1.msra.mxu0 0.0
    %687 = vmatprep.subr.mxu0 0.0
    %688 = vmatpush1.msra.mxu0 0.0
    %689 = vmatprep.subr.mxu0 0.0
    %690 = vmatpush1.msra.mxu0 0.0
    %691 = vmatprep.mubr.f32.mxu0 0.0
    %692 = vmatmul.mubr.f32.gmra.mrb[0].mxu0 %v622
    %v693 = vpop.f32.mrb[0].mxu0
    %v694 = vadd.f32 0.0, %v693
    %v695 = vpop.f32.mrb[0].mxu0
    %696 = vmatprep.mubr.f32.mxu0 0.0
    %697 = vmatmul.mubr.f32.gmra.mrb[0].mxu0 %v625
    %v698 = vpop.f32.mrb[0].mxu0
    %v699 = vadd.f32 0.0, %v698
    %v700 = vpop.f32.mrb[0].mxu0
    %701 = vdwg.mxu0
    %v702 = vadd.f32 %v603, %v694
    %v703 = vadd.f32 %v608, %v699
    %v704 = vld [vmem:[%s4] sm:$0x1]
    %v706 = vlaneseq
    %v707 = vshrl.u32 %v706, 7
    %v708 = vsub.s32 0, %v707
    %v709 = vrot.slane %v704, %v708
    %v711 = vadd.f32 %v702, %v709
    %v712 = vadd.f32 %v703, %v709
    %v713 = vmax.f32 %v711, 0.0
    %v714 = vmax.f32 %v712, 0.0
    %vm715 = vcmask 654336
    %716 = vst.msk [vmem:[#allocation3] sm:$0xff] %vm715, %v713
    %717 = vst.msk [vmem:[#allocation3 + $0x8] sm:$0xff] %vm715, %v714
    %v718 = vld [vmem:[#allocation3] ss:$8 sm:$0x3]
    %v719 = vld [vmem:[%s5] sm:$0xff]
    %v720 = vld [vmem:[%s5 + $0x8] sm:$0xff]
    %v721 = vld [vmem:[%s5 + $0x10] sm:$0xff]
    %v722 = vld [vmem:[%s5 + $0x18] sm:$0xff]
    %v723 = vld [vmem:[%s5 + $0x20] sm:$0xff]
    %v724 = vld [vmem:[%s5 + $0x28] sm:$0xff]
    %v725 = vld [vmem:[%s5 + $0x30] sm:$0xff]
    %v726 = vld [vmem:[%s5 + $0x38] sm:$0xff]
    %v727 = vld [vmem:[%s5 + $0x40] sm:$0xff]
    %v728 = vld [vmem:[%s5 + $0x48] sm:$0xff]
    %s729 = scalar_lea.vmem [#allocation3], 1
    %v730 = vld [vmem:[%s729] ss:$8 sm:$0x3]
    %s731 = scalar_lea.vmem %s5, 80
    %v732 = vld [vmem:[%s731] sm:$0xff]
    %v733 = vld [vmem:[%s731 + $0x8] sm:$0xff]
    %v734 = vld [vmem:[%s731 + $0x10] sm:$0xff]
    %v735 = vld [vmem:[%s731 + $0x18] sm:$0xff]
    %v736 = vld [vmem:[%s731 + $0x20] sm:$0xff]
    %v737 = vld [vmem:[%s731 + $0x28] sm:$0xff]
    %v738 = vld [vmem:[%s731 + $0x30] sm:$0xff]
    %v739 = vld [vmem:[%s731 + $0x38] sm:$0xff]
    %v740 = vld [vmem:[%s731 + $0x40] sm:$0xff]
    %v741 = vld [vmem:[%s731 + $0x48] sm:$0xff]
    %v743 = vsel %vm715, %v730, 0
    %745 = vmatprep.subr.mxu0 0.0
    %746 = vmatpush1.msra.mxu0 %v732
    %747 = vmatprep.subr.mxu0 0.0
    %748 = vmatpush1.msra.mxu0 %v733
    %749 = vmatprep.subr.mxu0 0.0
    %750 = vmatpush1.msra.mxu0 %v734
    %751 = vmatprep.subr.mxu0 0.0
    %752 = vmatpush1.msra.mxu0 %v735
    %753 = vmatprep.subr.mxu0 0.0
    %754 = vmatpush1.msra.mxu0 %v736
    %755 = vmatprep.subr.mxu0 0.0
    %756 = vmatpush1.msra.mxu0 %v737
    %757 = vmatprep.subr.mxu0 0.0
    %758 = vmatpush1.msra.mxu0 %v738
    %759 = vmatprep.subr.mxu0 0.0
    %760 = vmatpush1.msra.mxu0 %v739
    %761 = vmatprep.subr.mxu0 0.0
    %762 = vmatpush1.msra.mxu0 %v740
    %763 = vmatprep.subr.mxu0 0.0
    %764 = vmatpush1.msra.mxu0 %v741
    %765 = vmatprep.subr.mxu0 0.0
    %766 = vmatpush1.msra.mxu0 0.0
    %767 = vmatprep.subr.mxu0 0.0
    %768 = vmatpush1.msra.mxu0 0.0
    %769 = vmatprep.subr.mxu0 0.0
    %770 = vmatpush1.msra.mxu0 0.0
    %771 = vmatprep.subr.mxu0 0.0
    %772 = vmatpush1.msra.mxu0 0.0
    %773 = vmatprep.subr.mxu0 0.0
    %774 = vmatpush1.msra.mxu0 0.0
    %775 = vmatprep.subr.mxu0 0.0
    %776 = vmatpush1.msra.mxu0 0.0
    %777 = vmatprep.subr.mxu0 0.0
    %778 = vmatpush1.msra.mxu0 0.0
    %779 = vmatprep.subr.mxu0 0.0
    %780 = vmatpush1.msra.mxu0 0.0
    %781 = vmatprep.subr.mxu0 0.0
    %782 = vmatpush1.msra.mxu0 0.0
    %783 = vmatprep.subr.mxu0 0.0
    %784 = vmatpush1.msra.mxu0 0.0
    %785 = vmatprep.subr.mxu0 0.0
    %786 = vmatpush1.msra.mxu0 0.0
    %787 = vmatprep.subr.mxu0 0.0
    %788 = vmatpush1.msra.mxu0 0.0
    %789 = vmatprep.subr.mxu0 0.0
    %790 = vmatpush1.msra.mxu0 0.0
    %791 = vmatprep.subr.mxu0 0.0
    %792 = vmatpush1.msra.mxu0 0.0
    %793 = vmatprep.subr.mxu0 0.0
    %794 = vmatpush1.msra.mxu0 0.0
    %795 = vmatprep.subr.mxu0 0.0
    %796 = vmatpush1.msra.mxu0 0.0
    %797 = vmatprep.subr.mxu0 0.0
    %798 = vmatpush1.msra.mxu0 0.0
    %799 = vmatprep.subr.mxu0 0.0
    %800 = vmatpush1.msra.mxu0 0.0
    %801 = vmatprep.subr.mxu0 0.0
    %802 = vmatpush1.msra.mxu0 0.0
    %803 = vmatprep.subr.mxu0 0.0
    %804 = vmatpush1.msra.mxu0 0.0
    %805 = vmatprep.subr.mxu0 0.0
    %806 = vmatpush1.msra.mxu0 0.0
    %807 = vmatprep.subr.mxu0 0.0
    %808 = vmatpush1.msra.mxu0 0.0
    %809 = vmatprep.mubr.f32.mxu0 0.0
    %810 = vmatmul.mubr.f32.gmra.mrb[0].mxu0 %v743
    %v811 = vpop.f32.mrb[0].mxu0
    %v812 = vadd.f32 0.0, %v811
    %v813 = vpop.f32.mrb[0].mxu0
    %814 = vdwg.mxu0
    %v816 = vsel %vm715, %v718, 0
    %818 = vmatprep.subr.mxu0 0.0
    %819 = vmatpush1.msra.mxu0 %v719
    %820 = vmatprep.subr.mxu0 0.0
    %821 = vmatpush1.msra.mxu0 %v720
    %822 = vmatprep.subr.mxu0 0.0
    %823 = vmatpush1.msra.mxu0 %v721
    %824 = vmatprep.subr.mxu0 0.0
    %825 = vmatpush1.msra.mxu0 %v722
    %826 = vmatprep.subr.mxu0 0.0
    %827 = vmatpush1.msra.mxu0 %v723
    %828 = vmatprep.subr.mxu0 0.0
    %829 = vmatpush1.msra.mxu0 %v724
    %830 = vmatprep.subr.mxu0 0.0
    %831 = vmatpush1.msra.mxu0 %v725
    %832 = vmatprep.subr.mxu0 0.0
    %833 = vmatpush1.msra.mxu0 %v726
    %834 = vmatprep.subr.mxu0 0.0
    %835 = vmatpush1.msra.mxu0 %v727
    %836 = vmatprep.subr.mxu0 0.0
    %837 = vmatpush1.msra.mxu0 %v728
    %838 = vmatprep.subr.mxu0 0.0
    %839 = vmatpush1.msra.mxu0 0.0
    %840 = vmatprep.subr.mxu0 0.0
    %841 = vmatpush1.msra.mxu0 0.0
    %842 = vmatprep.subr.mxu0 0.0
    %843 = vmatpush1.msra.mxu0 0.0
    %844 = vmatprep.subr.mxu0 0.0
    %845 = vmatpush1.msra.mxu0 0.0
    %846 = vmatprep.subr.mxu0 0.0
    %847 = vmatpush1.msra.mxu0 0.0
    %848 = vmatprep.subr.mxu0 0.0
    %849 = vmatpush1.msra.mxu0 0.0
    %850 = vmatprep.subr.mxu0 0.0
    %851 = vmatpush1.msra.mxu0 0.0
    %852 = vmatprep.subr.mxu0 0.0
    %853 = vmatpush1.msra.mxu0 0.0
    %854 = vmatprep.subr.mxu0 0.0
    %855 = vmatpush1.msra.mxu0 0.0
    %856 = vmatprep.subr.mxu0 0.0
    %857 = vmatpush1.msra.mxu0 0.0
    %858 = vmatprep.subr.mxu0 0.0
    %859 = vmatpush1.msra.mxu0 0.0
    %860 = vmatprep.subr.mxu0 0.0
    %861 = vmatpush1.msra.mxu0 0.0
    %862 = vmatprep.subr.mxu0 0.0
    %863 = vmatpush1.msra.mxu0 0.0
    %864 = vmatprep.subr.mxu0 0.0
    %865 = vmatpush1.msra.mxu0 0.0
    %866 = vmatprep.subr.mxu0 0.0
    %867 = vmatpush1.msra.mxu0 0.0
    %868 = vmatprep.subr.mxu0 0.0
    %869 = vmatpush1.msra.mxu0 0.0
    %870 = vmatprep.subr.mxu0 0.0
    %871 = vmatpush1.msra.mxu0 0.0
    %872 = vmatprep.subr.mxu0 0.0
    %873 = vmatpush1.msra.mxu0 0.0
    %874 = vmatprep.subr.mxu0 0.0
    %875 = vmatpush1.msra.mxu0 0.0
    %876 = vmatprep.subr.mxu0 0.0
    %877 = vmatpush1.msra.mxu0 0.0
    %878 = vmatprep.subr.mxu0 0.0
    %879 = vmatpush1.msra.mxu0 0.0
    %880 = vmatprep.subr.mxu0 0.0
    %881 = vmatpush1.msra.mxu0 0.0
    %882 = vmatprep.mubr.f32.mxu0 0.0
    %883 = vmatmul.mubr.f32.gmra.mrb[0].mxu0 %v816
    %v884 = vpop.f32.mrb[0].mxu0
    %v885 = vadd.f32 %v812, %v884
    %v886 = vpop.f32.mrb[0].mxu0
    %887 = vdwg.mxu0
    %s888 = scalar_lea.vmem [#allocation3], 2
    %v889 = vld [vmem:[%s888] ss:$8 sm:$0x3]
    %s890 = scalar_lea.vmem %s5, 160
    %v891 = vld [vmem:[%s890] sm:$0xff]
    %v892 = vld [vmem:[%s890 + $0x8] sm:$0xff]
    %v893 = vld [vmem:[%s890 + $0x10] sm:$0xff]
    %v894 = vld [vmem:[%s890 + $0x18] sm:$0xff]
    %v895 = vld [vmem:[%s890 + $0x20] sm:$0xff]
    %v896 = vld [vmem:[%s890 + $0x28] sm:$0xff]
    %v897 = vld [vmem:[%s890 + $0x30] sm:$0xff]
    %v898 = vld [vmem:[%s890 + $0x38] sm:$0xff]
    %v899 = vld [vmem:[%s890 + $0x40] sm:$0xff]
    %v900 = vld [vmem:[%s890 + $0x48] sm:$0xff]
    %v902 = vsel %vm715, %v889, 0
    %904 = vmatprep.subr.mxu0 0.0
    %905 = vmatpush1.msra.mxu0 %v891
    %906 = vmatprep.subr.mxu0 0.0
    %907 = vmatpush1.msra.mxu0 %v892
    %908 = vmatprep.subr.mxu0 0.0
    %909 = vmatpush1.msra.mxu0 %v893
    %910 = vmatprep.subr.mxu0 0.0
    %911 = vmatpush1.msra.mxu0 %v894
    %912 = vmatprep.subr.mxu0 0.0
    %913 = vmatpush1.msra.mxu0 %v895
    %914 = vmatprep.subr.mxu0 0.0
    %915 = vmatpush1.msra.mxu0 %v896
    %916 = vmatprep.subr.mxu0 0.0
    %917 = vmatpush1.msra.mxu0 %v897
    %918 = vmatprep.subr.mxu0 0.0
    %919 = vmatpush1.msra.mxu0 %v898
    %920 = vmatprep.subr.mxu0 0.0
    %921 = vmatpush1.msra.mxu0 %v899
    %922 = vmatprep.subr.mxu0 0.0
    %923 = vmatpush1.msra.mxu0 %v900
    %924 = vmatprep.subr.mxu0 0.0
    %925 = vmatpush1.msra.mxu0 0.0
    %926 = vmatprep.subr.mxu0 0.0
    %927 = vmatpush1.msra.mxu0 0.0
    %928 = vmatprep.subr.mxu0 0.0
    %929 = vmatpush1.msra.mxu0 0.0
    %930 = vmatprep.subr.mxu0 0.0
    %931 = vmatpush1.msra.mxu0 0.0
    %932 = vmatprep.subr.mxu0 0.0
    %933 = vmatpush1.msra.mxu0 0.0
    %934 = vmatprep.subr.mxu0 0.0
    %935 = vmatpush1.msra.mxu0 0.0
    %936 = vmatprep.subr.mxu0 0.0
    %937 = vmatpush1.msra.mxu0 0.0
    %938 = vmatprep.subr.mxu0 0.0
    %939 = vmatpush1.msra.mxu0 0.0
    %940 = vmatprep.subr.mxu0 0.0
    %941 = vmatpush1.msra.mxu0 0.0
    %942 = vmatprep.subr.mxu0 0.0
    %943 = vmatpush1.msra.mxu0 0.0
    %944 = vmatprep.subr.mxu0 0.0
    %945 = vmatpush1.msra.mxu0 0.0
    %946 = vmatprep.subr.mxu0 0.0
    %947 = vmatpush1.msra.mxu0 0.0
    %948 = vmatprep.subr.mxu0 0.0
    %949 = vmatpush1.msra.mxu0 0.0
    %950 = vmatprep.subr.mxu0 0.0
    %951 = vmatpush1.msra.mxu0 0.0
    %952 = vmatprep.subr.mxu0 0.0
    %953 = vmatpush1.msra.mxu0 0.0
    %954 = vmatprep.subr.mxu0 0.0
    %955 = vmatpush1.msra.mxu0 0.0
    %956 = vmatprep.subr.mxu0 0.0
    %957 = vmatpush1.msra.mxu0 0.0
    %958 = vmatprep.subr.mxu0 0.0
    %959 = vmatpush1.msra.mxu0 0.0
    %960 = vmatprep.subr.mxu0 0.0
    %961 = vmatpush1.msra.mxu0 0.0
    %962 = vmatprep.subr.mxu0 0.0
    %963 = vmatpush1.msra.mxu0 0.0
    %964 = vmatprep.subr.mxu0 0.0
    %965 = vmatpush1.msra.mxu0 0.0
    %966 = vmatprep.subr.mxu0 0.0
    %967 = vmatpush1.msra.mxu0 0.0
    %968 = vmatprep.mubr.f32.mxu0 0.0
    %969 = vmatmul.mubr.f32.gmra.mrb[0].mxu0 %v902
    %v970 = vpop.f32.mrb[0].mxu0
    %v971 = vadd.f32 0.0, %v970
    %v972 = vpop.f32.mrb[0].mxu0
    %973 = vdwg.mxu0
    %v974 = vadd.f32 %v885, %v971
    %s975 = scalar_lea.vmem [#allocation3], 3
    %v976 = vld [vmem:[%s975] ss:$8 sm:$0x3]
    %s977 = scalar_lea.vmem %s5, 240
    %v978 = vld [vmem:[%s977] sm:$0xff]
    %v979 = vld [vmem:[%s977 + $0x8] sm:$0xff]
    %v980 = vld [vmem:[%s977 + $0x10] sm:$0xff]
    %v981 = vld [vmem:[%s977 + $0x18] sm:$0xff]
    %v982 = vld [vmem:[%s977 + $0x20] sm:$0xff]
    %v983 = vld [vmem:[%s977 + $0x28] sm:$0xff]
    %v984 = vld [vmem:[%s977 + $0x30] sm:$0xff]
    %v985 = vld [vmem:[%s977 + $0x38] sm:$0xff]
    %v986 = vld [vmem:[%s977 + $0x40] sm:$0xff]
    %v987 = vld [vmem:[%s977 + $0x48] sm:$0xff]
    %v989 = vsel %vm715, %v976, 0
    %991 = vmatprep.subr.mxu0 0.0
    %992 = vmatpush1.msra.mxu0 %v978
    %993 = vmatprep.subr.mxu0 0.0
    %994 = vmatpush1.msra.mxu0 %v979
    %995 = vmatprep.subr.mxu0 0.0
    %996 = vmatpush1.msra.mxu0 %v980
    %997 = vmatprep.subr.mxu0 0.0
    %998 = vmatpush1.msra.mxu0 %v981
    %999 = vmatprep.subr.mxu0 0.0
    %1000 = vmatpush1.msra.mxu0 %v982
    %1001 = vmatprep.subr.mxu0 0.0
    %1002 = vmatpush1.msra.mxu0 %v983
    %1003 = vmatprep.subr.mxu0 0.0
    %1004 = vmatpush1.msra.mxu0 %v984
    %1005 = vmatprep.subr.mxu0 0.0
    %1006 = vmatpush1.msra.mxu0 %v985
    %1007 = vmatprep.subr.mxu0 0.0
    %1008 = vmatpush1.msra.mxu0 %v986
    %1009 = vmatprep.subr.mxu0 0.0
    %1010 = vmatpush1.msra.mxu0 %v987
    %1011 = vmatprep.subr.mxu0 0.0
    %1012 = vmatpush1.msra.mxu0 0.0
    %1013 = vmatprep.subr.mxu0 0.0
    %1014 = vmatpush1.msra.mxu0 0.0
    %1015 = vmatprep.subr.mxu0 0.0
    %1016 = vmatpush1.msra.mxu0 0.0
    %1017 = vmatprep.subr.mxu0 0.0
    %1018 = vmatpush1.msra.mxu0 0.0
    %1019 = vmatprep.subr.mxu0 0.0
    %1020 = vmatpush1.msra.mxu0 0.0
    %1021 = vmatprep.subr.mxu0 0.0
    %1022 = vmatpush1.msra.mxu0 0.0
    %1023 = vmatprep.subr.mxu0 0.0
    %1024 = vmatpush1.msra.mxu0 0.0
    %1025 = vmatprep.subr.mxu0 0.0
    %1026 = vmatpush1.msra.mxu0 0.0
    %1027 = vmatprep.subr.mxu0 0.0
    %1028 = vmatpush1.msra.mxu0 0.0
    %1029 = vmatprep.subr.mxu0 0.0
    %1030 = vmatpush1.msra.mxu0 0.0
    %1031 = vmatprep.subr.mxu0 0.0
    %1032 = vmatpush1.msra.mxu0 0.0
    %1033 = vmatprep.subr.mxu0 0.0
    %1034 = vmatpush1.msra.mxu0 0.0
    %1035 = vmatprep.subr.mxu0 0.0
    %1036 = vmatpush1.msra.mxu0 0.0
    %1037 = vmatprep.subr.mxu0 0.0
    %1038 = vmatpush1.msra.mxu0 0.0
    %1039 = vmatprep.subr.mxu0 0.0
    %1040 = vmatpush1.msra.mxu0 0.0
    %1041 = vmatprep.subr.mxu0 0.0
    %1042 = vmatpush1.msra.mxu0 0.0
    %1043 = vmatprep.subr.mxu0 0.0
    %1044 = vmatpush1.msra.mxu0 0.0
    %1045 = vmatprep.subr.mxu0 0.0
    %1046 = vmatpush1.msra.mxu0 0.0
    %1047 = vmatprep.subr.mxu0 0.0
    %1048 = vmatpush1.msra.mxu0 0.0
    %1049 = vmatprep.subr.mxu0 0.0
    %1050 = vmatpush1.msra.mxu0 0.0
    %1051 = vmatprep.subr.mxu0 0.0
    %1052 = vmatpush1.msra.mxu0 0.0
    %1053 = vmatprep.subr.mxu0 0.0
    %1054 = vmatpush1.msra.mxu0 0.0
    %1055 = vmatprep.mubr.f32.mxu0 0.0
    %1056 = vmatmul.mubr.f32.gmra.mrb[0].mxu0 %v989
    %v1057 = vpop.f32.mrb[0].mxu0
    %v1058 = vadd.f32 0.0, %v1057
    %v1059 = vpop.f32.mrb[0].mxu0
    %1060 = vdwg.mxu0
    %v1061 = vadd.f32 %v974, %v1058
    %s1062 = scalar_lea.vmem [#allocation3], 4
    %v1063 = vld [vmem:[%s1062] ss:$8 sm:$0x3]
    %s1064 = scalar_lea.vmem %s5, 320
    %v1065 = vld [vmem:[%s1064] sm:$0xff]
    %v1066 = vld [vmem:[%s1064 + $0x8] sm:$0xff]
    %v1067 = vld [vmem:[%s1064 + $0x10] sm:$0xff]
    %v1068 = vld [vmem:[%s1064 + $0x18] sm:$0xff]
    %v1069 = vld [vmem:[%s1064 + $0x20] sm:$0xff]
    %v1070 = vld [vmem:[%s1064 + $0x28] sm:$0xff]
    %v1071 = vld [vmem:[%s1064 + $0x30] sm:$0xff]
    %v1072 = vld [vmem:[%s1064 + $0x38] sm:$0xff]
    %v1073 = vld [vmem:[%s1064 + $0x40] sm:$0xff]
    %v1074 = vld [vmem:[%s1064 + $0x48] sm:$0xff]
    %v1076 = vsel %vm715, %v1063, 0
    %1078 = vmatprep.subr.mxu0 0.0
    %1079 = vmatpush1.msra.mxu0 %v1065
    %1080 = vmatprep.subr.mxu0 0.0
    %1081 = vmatpush1.msra.mxu0 %v1066
    %1082 = vmatprep.subr.mxu0 0.0
    %1083 = vmatpush1.msra.mxu0 %v1067
    %1084 = vmatprep.subr.mxu0 0.0
    %1085 = vmatpush1.msra.mxu0 %v1068
    %1086 = vmatprep.subr.mxu0 0.0
    %1087 = vmatpush1.msra.mxu0 %v1069
    %1088 = vmatprep.subr.mxu0 0.0
    %1089 = vmatpush1.msra.mxu0 %v1070
    %1090 = vmatprep.subr.mxu0 0.0
    %1091 = vmatpush1.msra.mxu0 %v1071
    %1092 = vmatprep.subr.mxu0 0.0
    %1093 = vmatpush1.msra.mxu0 %v1072
    %1094 = vmatprep.subr.mxu0 0.0
    %1095 = vmatpush1.msra.mxu0 %v1073
    %1096 = vmatprep.subr.mxu0 0.0
    %1097 = vmatpush1.msra.mxu0 %v1074
    %1098 = vmatprep.subr.mxu0 0.0
    %1099 = vmatpush1.msra.mxu0 0.0
    %1100 = vmatprep.subr.mxu0 0.0
    %1101 = vmatpush1.msra.mxu0 0.0
    %1102 = vmatprep.subr.mxu0 0.0
    %1103 = vmatpush1.msra.mxu0 0.0
    %1104 = vmatprep.subr.mxu0 0.0
    %1105 = vmatpush1.msra.mxu0 0.0
    %1106 = vmatprep.subr.mxu0 0.0
    %1107 = vmatpush1.msra.mxu0 0.0
    %1108 = vmatprep.subr.mxu0 0.0
    %1109 = vmatpush1.msra.mxu0 0.0
    %1110 = vmatprep.subr.mxu0 0.0
    %1111 = vmatpush1.msra.mxu0 0.0
    %1112 = vmatprep.subr.mxu0 0.0
    %1113 = vmatpush1.msra.mxu0 0.0
    %1114 = vmatprep.subr.mxu0 0.0
    %1115 = vmatpush1.msra.mxu0 0.0
    %1116 = vmatprep.subr.mxu0 0.0
    %1117 = vmatpush1.msra.mxu0 0.0
    %1118 = vmatprep.subr.mxu0 0.0
    %1119 = vmatpush1.msra.mxu0 0.0
    %1120 = vmatprep.subr.mxu0 0.0
    %1121 = vmatpush1.msra.mxu0 0.0
    %1122 = vmatprep.subr.mxu0 0.0
    %1123 = vmatpush1.msra.mxu0 0.0
    %1124 = vmatprep.subr.mxu0 0.0
    %1125 = vmatpush1.msra.mxu0 0.0
    %1126 = vmatprep.subr.mxu0 0.0
    %1127 = vmatpush1.msra.mxu0 0.0
    %1128 = vmatprep.subr.mxu0 0.0
    %1129 = vmatpush1.msra.mxu0 0.0
    %1130 = vmatprep.subr.mxu0 0.0
    %1131 = vmatpush1.msra.mxu0 0.0
    %1132 = vmatprep.subr.mxu0 0.0
    %1133 = vmatpush1.msra.mxu0 0.0
    %1134 = vmatprep.subr.mxu0 0.0
    %1135 = vmatpush1.msra.mxu0 0.0
    %1136 = vmatprep.subr.mxu0 0.0
    %1137 = vmatpush1.msra.mxu0 0.0
    %1138 = vmatprep.subr.mxu0 0.0
    %1139 = vmatpush1.msra.mxu0 0.0
    %1140 = vmatprep.subr.mxu0 0.0
    %1141 = vmatpush1.msra.mxu0 0.0
    %1142 = vmatprep.mubr.f32.mxu0 0.0
    %1143 = vmatmul.mubr.f32.gmra.mrb[0].mxu0 %v1076
    %v1144 = vpop.f32.mrb[0].mxu0
    %v1145 = vadd.f32 0.0, %v1144
    %v1146 = vpop.f32.mrb[0].mxu0
    %1147 = vdwg.mxu0
    %v1148 = vadd.f32 %v1061, %v1145
    %v1149 = vld [vmem:[%s6] sm:$0x1]
    %v1151 = vlaneseq
    %v1152 = vshrl.u32 %v1151, 7
    %v1153 = vsub.s32 0, %v1152
    %v1154 = vrot.slane %v1149, %v1153
    %v1156 = vadd.f32 %v1148, %v1154
    %v1157 = vmax.f32 %v1156, 0.0
    %v1158 = vld [vmem:[%s7] sm:$0xff]
    %v1159 = vld [vmem:[%s7 + $0x8] sm:$0xff]
    %v1160 = vld [vmem:[%s7 + $0x10] sm:$0xff]
    %v1161 = vld [vmem:[%s7 + $0x18] sm:$0xff]
    %v1162 = vld [vmem:[%s8] sm:$0x1]
    %v1164 = vlaneseq
    %v1165 = vshrl.u32 %v1164, 7
    %v1166 = vsub.s32 0, %v1165
    %v1167 = vrot.slane %v1162, %v1166
    %vm1169 = vcmask 261120
    %v1171 = vsel %vm1169, %v1157, 0
    %1173 = vmatprep.subr.mxu0 0.0
    %1174 = vmatpush1.msra.mxu0 %v1158
    %1175 = vmatprep.subr.mxu0 0.0
    %1176 = vmatpush1.msra.mxu0 %v1159
    %1177 = vmatprep.subr.mxu0 0.0
    %1178 = vmatpush1.msra.mxu0 %v1160
    %1179 = vmatprep.subr.mxu0 0.0
    %1180 = vmatpush1.msra.mxu0 %v1161
    %1181 = vmatprep.subr.mxu0 0.0
    %1182 = vmatpush1.msra.mxu0 0.0
    %1183 = vmatprep.subr.mxu0 0.0
    %1184 = vmatpush1.msra.mxu0 0.0
    %1185 = vmatprep.subr.mxu0 0.0
    %1186 = vmatpush1.msra.mxu0 0.0
    %1187 = vmatprep.subr.mxu0 0.0
    %1188 = vmatpush1.msra.mxu0 0.0
    %1189 = vmatprep.subr.mxu0 0.0
    %1190 = vmatpush1.msra.mxu0 0.0
    %1191 = vmatprep.subr.mxu0 0.0
    %1192 = vmatpush1.msra.mxu0 0.0
    %1193 = vmatprep.subr.mxu0 0.0
    %1194 = vmatpush1.msra.mxu0 0.0
    %1195 = vmatprep.subr.mxu0 0.0
    %1196 = vmatpush1.msra.mxu0 0.0
    %1197 = vmatprep.subr.mxu0 0.0
    %1198 = vmatpush1.msra.mxu0 0.0
    %1199 = vmatprep.subr.mxu0 0.0
    %1200 = vmatpush1.msra.mxu0 0.0
    %1201 = vmatprep.subr.mxu0 0.0
    %1202 = vmatpush1.msra.mxu0 0.0
    %1203 = vmatprep.subr.mxu0 0.0
    %1204 = vmatpush1.msra.mxu0 0.0
    %1205 = vmatprep.subr.mxu0 0.0
    %1206 = vmatpush1.msra.mxu0 0.0
    %1207 = vmatprep.subr.mxu0 0.0
    %1208 = vmatpush1.msra.mxu0 0.0
    %1209 = vmatprep.subr.mxu0 0.0
    %1210 = vmatpush1.msra.mxu0 0.0
    %1211 = vmatprep.subr.mxu0 0.0
    %1212 = vmatpush1.msra.mxu0 0.0
    %1213 = vmatprep.subr.mxu0 0.0
    %1214 = vmatpush1.msra.mxu0 0.0
    %1215 = vmatprep.subr.mxu0 0.0
    %1216 = vmatpush1.msra.mxu0 0.0
    %1217 = vmatprep.subr.mxu0 0.0
    %1218 = vmatpush1.msra.mxu0 0.0
    %1219 = vmatprep.subr.mxu0 0.0
    %1220 = vmatpush1.msra.mxu0 0.0
    %1221 = vmatprep.subr.mxu0 0.0
    %1222 = vmatpush1.msra.mxu0 0.0
    %1223 = vmatprep.subr.mxu0 0.0
    %1224 = vmatpush1.msra.mxu0 0.0
    %1225 = vmatprep.subr.mxu0 0.0
    %1226 = vmatpush1.msra.mxu0 0.0
    %1227 = vmatprep.subr.mxu0 0.0
    %1228 = vmatpush1.msra.mxu0 0.0
    %1229 = vmatprep.subr.mxu0 0.0
    %1230 = vmatpush1.msra.mxu0 0.0
    %1231 = vmatprep.subr.mxu0 0.0
    %1232 = vmatpush1.msra.mxu0 0.0
    %1233 = vmatprep.subr.mxu0 0.0
    %1234 = vmatpush1.msra.mxu0 0.0
    %1235 = vmatprep.subr.mxu0 0.0
    %1236 = vmatpush1.msra.mxu0 0.0
    %1237 = vmatprep.mubr.f32.mxu0 0.0
    %1238 = vmatmul.mubr.f32.gmra.mrb[0].mxu0 %v1171
    %v1239 = vpop.f32.mrb[0].mxu0
    %v1240 = vadd.f32 %v1167, %v1239
    %v1241 = vpop.f32.mrb[0].mxu0
    %1242 = vdwg.mxu0
    %1243 = vst [vmem:[#allocation4] sm:$0x3] %v1240
    // Predicated region
    $region38: #{mymodel_forward.1} parent=1 // pred_check
      _
    $region39: #{mymodel_forward.1} parent=1 // pred_check_branch
      %1245 = sbr.rel (0) target = $region41
    $region40: #{mymodel_forward.1} parent=1 // pred_region
      %s1247 = ssub.s32 32, 32
      %1248 = vsyncadd [#allocation5], %s1247
      %s1250 = sshll.u32 [#allocation4], 4
      %s1251 = int_to_ptr.vmem [resolvable:$true] %s1250
      %1253 = dma.vmem_to_hbm [thread:$0]  %s1251, 32, %s9, [#allocation5]
    $region41: #{mymodel_forward.1} parent=1 // pred_fallthru
      _
    // Predicated region
    $region42: #{mymodel_forward.1} parent=1 // pred_check
      _
    $region43: #{mymodel_forward.1} parent=1 // pred_check_branch
      %1255 = sbr.rel (0) target = $region45
    $region44: #{mymodel_forward.1} parent=1 // pred_region
      %1256 = dma.done [#allocation5], 32
    $region45: #{mymodel_forward.1} parent=1 // pred_fallthru
      _
    %1257 = vsyncpa [#allocation5], 1

</llo_original>
